<compile_context>
chip_gen: v7x
topology: tpu7x:2x2x1
jax: 0.10.0
libtpu: 0.0.40
codegen_flags: <defaults>
</compile_context>

<pallas_src>
import jax
import jax.numpy as jnp
from jax import lax
from jax.experimental import pallas as pl
from jax.experimental.pallas import tpu as pltpu

IN_DIM = 20
ENC_DIM = 4

# PyTorch nn.Linear native (out, in) shapes per layer.
LAYER_DIMS = ((40, 20), (24, 40), (4, 24), (24, 4), (40, 24), (20, 40))
# Zero-padded on-chip shapes: every activation row-count is a multiple of 8
# sublanes so the final on-chip transposes are cleanly tiled.  Zero weight
# rows give tanh(0)=0 activations and zero weight columns consume them, so the
# padded math is exactly the original math.
PADDED_DIMS = ((40, 20), (24, 40), (8, 24), (24, 8), (40, 24), (24, 40))

FLOPS_PER_ROW = 2 * sum(do * di for do, di in LAYER_DIMS)   # 7424
TANH_PER_ROW = sum(do for do, _ in LAYER_DIMS[:5])          # 132


def _round_up(n, m):
    return ((n + m - 1) // m) * m


def _cdiv(a, b):
    return (a + b - 1) // b


def sae_kernel(x_ref,
               w1, b1, w2, b2, w3, b3, w4, b4, w5, b5, w6, b6,
               enc_ref, rec_ref):
    """x_ref: (TB, 20) batch-major input tile (contiguous rows of x in HBM)."""
    x = x_ref[...]                                            # (TB, 20) f32

    # Layer 1: h1[o, t] = sum_k W1[o, k] * x[t, k]  == W1 @ x^T (trans_b matmul)
    h1 = lax.dot_general(w1[...], x, (((1,), (1,)), ((), ())),
                         preferred_element_type=jnp.float32) + b1[...]
    h1 = jnp.tanh(h1)                                         # (40, TB)

    def dense(w_ref, b_ref, h, apply_tanh=True):
        y = jnp.dot(w_ref[...], h,
                    preferred_element_type=jnp.float32) + b_ref[...]
        return jnp.tanh(y) if apply_tanh else y

    h2 = dense(w2, b2, h1)               # (24, TB)
    z = dense(w3, b3, h2)                # (8,  TB), rows 4..7 are exactly 0
    d1 = dense(w4, b4, z)                # (24, TB)
    d2 = dense(w5, b5, d1)               # (40, TB)
    r = dense(w6, b6, d2, False)         # (24, TB), rows 20..23 are exactly 0

    # On-chip transposes (XLU slot is idle) -> batch-major outputs; the wrapper
    # never touches HBM again except to drop batch padding.
    enc_ref[...] = jnp.transpose(z)[:, :ENC_DIM].astype(enc_ref.dtype)
    rec_ref[...] = jnp.transpose(r)[:, :IN_DIM].astype(rec_ref.dtype)


def init_params(key):
    """PyTorch nn.Linear default init: U(-1/sqrt(fan_in), 1/sqrt(fan_in))."""
    params = []
    for dout, din in LAYER_DIMS:
        key, kw, kb = jax.random.split(key, 3)
        bound = 1.0 / (din ** 0.5)
        w = jax.random.uniform(kw, (dout, din), jnp.float32, -bound, bound)
        b = jax.random.uniform(kb, (dout,), jnp.float32, -bound, bound)
        params.append((w, b))
    return params


def pack_params(params):
    """Zero-pad each (W, b) to PADDED_DIMS.  Returns a flat tuple
    (w1, b1, ..., w6, b6) of exact-shape kernel inputs (12 tiny one-time DMAs,
    constant index_maps keep them VMEM-resident across the whole grid)."""
    flat = []
    for (w, b), (pr, pc) in zip(params, PADDED_DIMS):
        dout, din = w.shape
        wp = jnp.zeros((pr, pc), jnp.float32).at[:dout, :din].set(w)
        bp = jnp.zeros((pr, 1), jnp.float32).at[:dout, 0].set(b)
        flat += [wp, bp]
    return tuple(flat)


def _choose_tiling(B, tb):
    """Pick (TB, Bp, nsteps).  TB is a multiple of 128 (lane axis).  When more
    than one tile is needed the step count is forced even so the 'parallel'
    batch axis splits evenly across v7x's two TensorCores."""
    tb = max(128, _round_up(tb, 128))
    if B <= tb:
        TB = _round_up(B, 128)
        return TB, TB, 1
    nsteps = _round_up(_cdiv(B, tb), 2)
    TB = _round_up(_cdiv(B, nsteps), 128)
    nsteps = _cdiv(B, TB)
    if nsteps > 1:
        nsteps = _round_up(nsteps, 2)
    return TB, TB * nsteps, nsteps


def sae_forward(x, packed, *, tb=8192):
    """x: (B, 20) f32 -> (enc (B, 4), rec (B, 20)).

    tb: target batch tile.  8192 amortizes the ~0.35us/grid-step overhead on
    v5e/v6e; on v7x (3.2 TB/s HBM) 16384-32768 is a good setting as long as the
    grid keeps >=2 steps per TensorCore.
    """
    B, F = x.shape
    assert F == IN_DIM
    TB, Bp, nsteps = _choose_tiling(B, tb)

    xp = x.astype(jnp.float32)
    if Bp != B:
        xp = jnp.pad(xp, ((0, Bp - B), (0, 0)))

    cost = pl.CostEstimate(
        flops=FLOPS_PER_ROW * Bp,
        transcendentals=TANH_PER_ROW * Bp,
        bytes_accessed=4 * Bp * (IN_DIM + ENC_DIM + IN_DIM)
        + 4 * sum(p.size for p in packed),
    )

    param_specs = [pl.BlockSpec(p.shape, lambda i: (0, 0)) for p in packed]

    enc, rec = pl.pallas_call(
        sae_kernel,
        out_shape=(
            jax.ShapeDtypeStruct((Bp, ENC_DIM), jnp.float32),
            jax.ShapeDtypeStruct((Bp, IN_DIM), jnp.float32),
        ),
        grid_spec=pltpu.PrefetchScalarGridSpec(
            num_scalar_prefetch=0,
            grid=(nsteps,),
            in_specs=[pl.BlockSpec((TB, IN_DIM), lambda i: (i, 0))] + param_specs,
            out_specs=[
                pl.BlockSpec((TB, ENC_DIM), lambda i: (i, 0)),
                pl.BlockSpec((TB, IN_DIM), lambda i: (i, 0)),
            ],
        ),
        compiler_params=pltpu.CompilerParams(
            dimension_semantics=("parallel",),
            vmem_limit_bytes=32 * 1024 * 1024,
        ),
        cost_estimate=cost,
    )(xp, *packed)

    if Bp != B:
        enc, rec = enc[:B], rec[:B]
    return enc, rec


def sae_reference(x, params):
    h = x
    for i in range(3):
        w, b = params[i]
        h = jnp.tanh(h @ w.T + b)
    enc = h
    d = enc
    for i in range(3, 5):
        w, b = params[i]
        d = jnp.tanh(d @ w.T + b)
    w, b = params[5]
    rec = d @ w.T + b
    return enc, rec


if __name__ == "__main__":
    key = jax.random.PRNGKey(0)
    kx, kp = jax.random.split(key)
    params = init_params(kp)
    packed = pack_params(params)

    # 1) Multi-step grid (grid=(2,)): B=256 with a 128-row tile.
    B = 256
    x = jax.random.normal(kx, (B, IN_DIM), jnp.float32)
    enc, rec = sae_forward(x, packed, tb=128)
    enc = jax.block_until_ready(enc)
    rec = jax.block_until_ready(rec)
    enc_ref, rec_ref = sae_reference(x, params)
    assert enc.shape == (B, ENC_DIM) and rec.shape == (B, IN_DIM)
    assert jnp.allclose(enc, enc_ref, atol=1e-4, rtol=1e-4)
    assert jnp.allclose(rec, rec_ref, atol=1e-4, rtol=1e-4)

    # 2) Ragged batch (padding path), still an even grid.
    B2 = 200
    x2 = jax.random.normal(jax.random.PRNGKey(1), (B2, IN_DIM), jnp.float32)
    enc2, rec2 = sae_forward(x2, packed, tb=128)
    enc2 = jax.block_until_ready(enc2)
    rec2 = jax.block_until_ready(rec2)
    enc2_ref, rec2_ref = sae_reference(x2, params)
    assert enc2.shape == (B2, ENC_DIM) and rec2.shape == (B2, IN_DIM)
    assert jnp.allclose(enc2, enc2_ref, atol=1e-4, rtol=1e-4)
    assert jnp.allclose(rec2, rec2_ref, atol=1e-4, rtol=1e-4)

    # 3) Default large-tile path (single grid step for this small B).
    enc3, rec3 = sae_forward(x, packed)
    enc3 = jax.block_until_ready(enc3)
    rec3 = jax.block_until_ready(rec3)
    assert jnp.allclose(enc3, enc_ref, atol=1e-4, rtol=1e-4)
    assert jnp.allclose(rec3, rec_ref, atol=1e-4, rtol=1e-4)

    print("KERNEL_OK")
</pallas_src>

<mosaic_0001>
module attributes {stable_mosaic.version = 11 : i64} {
  func.func @sae_kernel(%arg0: i32, %arg1: memref<128x20xf32, #tpu.memory_space<vmem>>, %arg2: memref<40x20xf32, #tpu.memory_space<vmem>>, %arg3: memref<40x1xf32, #tpu.memory_space<vmem>>, %arg4: memref<24x40xf32, #tpu.memory_space<vmem>>, %arg5: memref<24x1xf32, #tpu.memory_space<vmem>>, %arg6: memref<8x24xf32, #tpu.memory_space<vmem>>, %arg7: memref<8x1xf32, #tpu.memory_space<vmem>>, %arg8: memref<24x8xf32, #tpu.memory_space<vmem>>, %arg9: memref<24x1xf32, #tpu.memory_space<vmem>>, %arg10: memref<40x24xf32, #tpu.memory_space<vmem>>, %arg11: memref<40x1xf32, #tpu.memory_space<vmem>>, %arg12: memref<24x40xf32, #tpu.memory_space<vmem>>, %arg13: memref<24x1xf32, #tpu.memory_space<vmem>>, %arg14: memref<128x4xf32, #tpu.memory_space<vmem>>, %arg15: memref<128x20xf32, #tpu.memory_space<vmem>>) attributes {dimension_semantics = [#tpu.dimension_semantics<parallel>], iteration_bounds = array<i64: 2>, scalar_prefetch = 0 : i64, scratch_operands = 0 : i64, tpu.core_type = #tpu.core_type<tc>, window_params = [{transform_indices = @transform_0, window_bounds = array<i64: 128, 20>}, {pipeline_mode = #tpu.pipeline_mode<synchronous>, transform_indices = @transform_1, window_bounds = array<i64: 40, 20>}, {pipeline_mode = #tpu.pipeline_mode<synchronous>, transform_indices = @transform_2, window_bounds = array<i64: 40, 1>}, {pipeline_mode = #tpu.pipeline_mode<synchronous>, transform_indices = @transform_3, window_bounds = array<i64: 24, 40>}, {pipeline_mode = #tpu.pipeline_mode<synchronous>, transform_indices = @transform_4, window_bounds = array<i64: 24, 1>}, {pipeline_mode = #tpu.pipeline_mode<synchronous>, transform_indices = @transform_5, window_bounds = array<i64: 8, 24>}, {pipeline_mode = #tpu.pipeline_mode<synchronous>, transform_indices = @transform_6, window_bounds = array<i64: 8, 1>}, {pipeline_mode = #tpu.pipeline_mode<synchronous>, transform_indices = @transform_7, window_bounds = array<i64: 24, 8>}, {pipeline_mode = #tpu.pipeline_mode<synchronous>, transform_indices = @transform_8, window_bounds = array<i64: 24, 1>}, {pipeline_mode = #tpu.pipeline_mode<synchronous>, transform_indices = @transform_9, window_bounds = array<i64: 40, 24>}, {pipeline_mode = #tpu.pipeline_mode<synchronous>, transform_indices = @transform_10, window_bounds = array<i64: 40, 1>}, {pipeline_mode = #tpu.pipeline_mode<synchronous>, transform_indices = @transform_11, window_bounds = array<i64: 24, 40>}, {pipeline_mode = #tpu.pipeline_mode<synchronous>, transform_indices = @transform_12, window_bounds = array<i64: 24, 1>}, {transform_indices = @transform_13, window_bounds = array<i64: 128, 4>}, {transform_indices = @transform_14, window_bounds = array<i64: 128, 20>}]} {
    %c0 = arith.constant 0 : index
    %c0_0 = arith.constant 0 : index
    %0 = vector.load %arg1[%c0, %c0_0] : memref<128x20xf32, #tpu.memory_space<vmem>>, vector<128x20xf32>
    %c0_1 = arith.constant 0 : index
    %c0_2 = arith.constant 0 : index
    %1 = vector.load %arg2[%c0_1, %c0_2] : memref<40x20xf32, #tpu.memory_space<vmem>>, vector<40x20xf32>
    %cst = arith.constant dense<0.000000e+00> : vector<40x128xf32>
    %2 = tpu.matmul %1, %0, %cst {dimension_numbers = #tpu.dot_dimension_numbers<[1], [1], [0], [0], [0, 0, 1, 0], [], []>} : vector<40x20xf32>, vector<128x20xf32>, vector<40x128xf32> -> vector<40x128xf32>
    %c0_3 = arith.constant 0 : index
    %c0_4 = arith.constant 0 : index
    %3 = vector.load %arg3[%c0_3, %c0_4] : memref<40x1xf32, #tpu.memory_space<vmem>>, vector<40x1xf32>
    %4 = vector.broadcast %3 : vector<40x1xf32> to vector<40x128xf32>
    %5 = arith.addf %2, %4 : vector<40x128xf32>
    %6 = math.tanh %5 : vector<40x128xf32>
    %c0_5 = arith.constant 0 : index
    %c0_6 = arith.constant 0 : index
    %7 = vector.load %arg4[%c0_5, %c0_6] : memref<24x40xf32, #tpu.memory_space<vmem>>, vector<24x40xf32>
    %cst_7 = arith.constant dense<0.000000e+00> : vector<24x128xf32>
    %8 = tpu.matmul %7, %6, %cst_7 {dimension_numbers = #tpu.dot_dimension_numbers<[1], [0], [0], [1], [0, 0, 1, 1], [], []>} : vector<24x40xf32>, vector<40x128xf32>, vector<24x128xf32> -> vector<24x128xf32>
    %c0_8 = arith.constant 0 : index
    %c0_9 = arith.constant 0 : index
    %9 = vector.load %arg5[%c0_8, %c0_9] : memref<24x1xf32, #tpu.memory_space<vmem>>, vector<24x1xf32>
    %10 = vector.broadcast %9 : vector<24x1xf32> to vector<24x128xf32>
    %11 = arith.addf %8, %10 : vector<24x128xf32>
    %12 = math.tanh %11 : vector<24x128xf32>
    %c0_10 = arith.constant 0 : index
    %c0_11 = arith.constant 0 : index
    %13 = vector.load %arg6[%c0_10, %c0_11] : memref<8x24xf32, #tpu.memory_space<vmem>>, vector<8x24xf32>
    %cst_12 = arith.constant dense<0.000000e+00> : vector<8x128xf32>
    %14 = tpu.matmul %13, %12, %cst_12 {dimension_numbers = #tpu.dot_dimension_numbers<[1], [0], [0], [1], [0, 0, 1, 1], [], []>} : vector<8x24xf32>, vector<24x128xf32>, vector<8x128xf32> -> vector<8x128xf32>
    %c0_13 = arith.constant 0 : index
    %c0_14 = arith.constant 0 : index
    %15 = vector.load %arg7[%c0_13, %c0_14] : memref<8x1xf32, #tpu.memory_space<vmem>>, vector<8x1xf32>
    %16 = vector.broadcast %15 : vector<8x1xf32> to vector<8x128xf32>
    %17 = arith.addf %14, %16 : vector<8x128xf32>
    %18 = math.tanh %17 : vector<8x128xf32>
    %c0_15 = arith.constant 0 : index
    %c0_16 = arith.constant 0 : index
    %19 = vector.load %arg8[%c0_15, %c0_16] : memref<24x8xf32, #tpu.memory_space<vmem>>, vector<24x8xf32>
    %cst_17 = arith.constant dense<0.000000e+00> : vector<24x128xf32>
    %20 = tpu.matmul %19, %18, %cst_17 {dimension_numbers = #tpu.dot_dimension_numbers<[1], [0], [0], [1], [0, 0, 1, 1], [], []>} : vector<24x8xf32>, vector<8x128xf32>, vector<24x128xf32> -> vector<24x128xf32>
    %c0_18 = arith.constant 0 : index
    %c0_19 = arith.constant 0 : index
    %21 = vector.load %arg9[%c0_18, %c0_19] : memref<24x1xf32, #tpu.memory_space<vmem>>, vector<24x1xf32>
    %22 = vector.broadcast %21 : vector<24x1xf32> to vector<24x128xf32>
    %23 = arith.addf %20, %22 : vector<24x128xf32>
    %24 = math.tanh %23 : vector<24x128xf32>
    %c0_20 = arith.constant 0 : index
    %c0_21 = arith.constant 0 : index
    %25 = vector.load %arg10[%c0_20, %c0_21] : memref<40x24xf32, #tpu.memory_space<vmem>>, vector<40x24xf32>
    %cst_22 = arith.constant dense<0.000000e+00> : vector<40x128xf32>
    %26 = tpu.matmul %25, %24, %cst_22 {dimension_numbers = #tpu.dot_dimension_numbers<[1], [0], [0], [1], [0, 0, 1, 1], [], []>} : vector<40x24xf32>, vector<24x128xf32>, vector<40x128xf32> -> vector<40x128xf32>
    %c0_23 = arith.constant 0 : index
    %c0_24 = arith.constant 0 : index
    %27 = vector.load %arg11[%c0_23, %c0_24] : memref<40x1xf32, #tpu.memory_space<vmem>>, vector<40x1xf32>
    %28 = vector.broadcast %27 : vector<40x1xf32> to vector<40x128xf32>
    %29 = arith.addf %26, %28 : vector<40x128xf32>
    %30 = math.tanh %29 : vector<40x128xf32>
    %c0_25 = arith.constant 0 : index
    %c0_26 = arith.constant 0 : index
    %31 = vector.load %arg12[%c0_25, %c0_26] : memref<24x40xf32, #tpu.memory_space<vmem>>, vector<24x40xf32>
    %cst_27 = arith.constant dense<0.000000e+00> : vector<24x128xf32>
    %32 = tpu.matmul %31, %30, %cst_27 {dimension_numbers = #tpu.dot_dimension_numbers<[1], [0], [0], [1], [0, 0, 1, 1], [], []>} : vector<24x40xf32>, vector<40x128xf32>, vector<24x128xf32> -> vector<24x128xf32>
    %c0_28 = arith.constant 0 : index
    %c0_29 = arith.constant 0 : index
    %33 = vector.load %arg13[%c0_28, %c0_29] : memref<24x1xf32, #tpu.memory_space<vmem>>, vector<24x1xf32>
    %34 = vector.broadcast %33 : vector<24x1xf32> to vector<24x128xf32>
    %35 = arith.addf %32, %34 : vector<24x128xf32>
    %36 = tpu.transpose %18, [1, 0] : vector<8x128xf32> -> vector<128x8xf32>
    %37 = vector.extract_strided_slice %36 {offsets = [0, 0], sizes = [128, 4], strides = [1, 1]} : vector<128x8xf32> to vector<128x4xf32>
    %c0_30 = arith.constant 0 : index
    %c0_31 = arith.constant 0 : index
    %38 = vector.load %arg14[%c0_30, %c0_31] : memref<128x4xf32, #tpu.memory_space<vmem>>, vector<128x4xf32>
    tpu.vector_store %arg14[%c0_30, %c0_31], %37 {strides = array<i32>} : memref<128x4xf32, #tpu.memory_space<vmem>>, vector<128x4xf32>,
    %39 = tpu.transpose %35, [1, 0] : vector<24x128xf32> -> vector<128x24xf32>
    %40 = vector.extract_strided_slice %39 {offsets = [0, 0], sizes = [128, 20], strides = [1, 1]} : vector<128x24xf32> to vector<128x20xf32>
    %c0_32 = arith.constant 0 : index
    %c0_33 = arith.constant 0 : index
    %41 = vector.load %arg15[%c0_32, %c0_33] : memref<128x20xf32, #tpu.memory_space<vmem>>, vector<128x20xf32>
    tpu.vector_store %arg15[%c0_32, %c0_33], %40 {strides = array<i32>} : memref<128x20xf32, #tpu.memory_space<vmem>>, vector<128x20xf32>,
    return
  }
  func.func @transform_0(%arg0: i32) -> (i32, i32) {
    %c0_i32 = arith.constant 0 : i32
    %c0_i32_0 = arith.constant 0 : i32
    return %arg0, %c0_i32 : i32, i32
  }
  func.func @transform_1(%arg0: i32) -> (i32, i32) {
    %c0_i32 = arith.constant 0 : i32
    %c0_i32_0 = arith.constant 0 : i32
    %c0_i32_1 = arith.constant 0 : i32
    return %c0_i32, %c0_i32_0 : i32, i32
  }
  func.func @transform_2(%arg0: i32) -> (i32, i32) {
    %c0_i32 = arith.constant 0 : i32
    %c0_i32_0 = arith.constant 0 : i32
    %c0_i32_1 = arith.constant 0 : i32
    return %c0_i32, %c0_i32_0 : i32, i32
  }
  func.func @transform_3(%arg0: i32) -> (i32, i32) {
    %c0_i32 = arith.constant 0 : i32
    %c0_i32_0 = arith.constant 0 : i32
    %c0_i32_1 = arith.constant 0 : i32
    return %c0_i32, %c0_i32_0 : i32, i32
  }
  func.func @transform_4(%arg0: i32) -> (i32, i32) {
    %c0_i32 = arith.constant 0 : i32
    %c0_i32_0 = arith.constant 0 : i32
    %c0_i32_1 = arith.constant 0 : i32
    return %c0_i32, %c0_i32_0 : i32, i32
  }
  func.func @transform_5(%arg0: i32) -> (i32, i32) {
    %c0_i32 = arith.constant 0 : i32
    %c0_i32_0 = arith.constant 0 : i32
    %c0_i32_1 = arith.constant 0 : i32
    return %c0_i32, %c0_i32_0 : i32, i32
  }
  func.func @transform_6(%arg0: i32) -> (i32, i32) {
    %c0_i32 = arith.constant 0 : i32
    %c0_i32_0 = arith.constant 0 : i32
    %c0_i32_1 = arith.constant 0 : i32
    return %c0_i32, %c0_i32_0 : i32, i32
  }
  func.func @transform_7(%arg0: i32) -> (i32, i32) {
    %c0_i32 = arith.constant 0 : i32
    %c0_i32_0 = arith.constant 0 : i32
    %c0_i32_1 = arith.constant 0 : i32
    return %c0_i32, %c0_i32_0 : i32, i32
  }
  func.func @transform_8(%arg0: i32) -> (i32, i32) {
    %c0_i32 = arith.constant 0 : i32
    %c0_i32_0 = arith.constant 0 : i32
    %c0_i32_1 = arith.constant 0 : i32
    return %c0_i32, %c0_i32_0 : i32, i32
  }
  func.func @transform_9(%arg0: i32) -> (i32, i32) {
    %c0_i32 = arith.constant 0 : i32
    %c0_i32_0 = arith.constant 0 : i32
    %c0_i32_1 = arith.constant 0 : i32
    return %c0_i32, %c0_i32_0 : i32, i32
  }
  func.func @transform_10(%arg0: i32) -> (i32, i32) {
    %c0_i32 = arith.constant 0 : i32
    %c0_i32_0 = arith.constant 0 : i32
    %c0_i32_1 = arith.constant 0 : i32
    return %c0_i32, %c0_i32_0 : i32, i32
  }
  func.func @transform_11(%arg0: i32) -> (i32, i32) {
    %c0_i32 = arith.constant 0 : i32
    %c0_i32_0 = arith.constant 0 : i32
    %c0_i32_1 = arith.constant 0 : i32
    return %c0_i32, %c0_i32_0 : i32, i32
  }
  func.func @transform_12(%arg0: i32) -> (i32, i32) {
    %c0_i32 = arith.constant 0 : i32
    %c0_i32_0 = arith.constant 0 : i32
    %c0_i32_1 = arith.constant 0 : i32
    return %c0_i32, %c0_i32_0 : i32, i32
  }
  func.func @transform_13(%arg0: i32) -> (i32, i32) {
    %c0_i32 = arith.constant 0 : i32
    %c0_i32_0 = arith.constant 0 : i32
    return %arg0, %c0_i32 : i32, i32
  }
  func.func @transform_14(%arg0: i32) -> (i32, i32) {
    %c0_i32 = arith.constant 0 : i32
    %c0_i32_0 = arith.constant 0 : i32
    return %arg0, %c0_i32 : i32, i32
  }
}

</mosaic_0001>

<llo_original>
// kernel: tpu_custom_call.1
$region0: #{tpu_custom_call.1}
  #allocation0 [shape = 'u32[]', space=smem, size = 0x4, offset = 0x4, fixed_abs, tag = 'smem constant byte address 0x4 - core index']
  #allocation1 [shape = 'u32[144,128]{1,0:T(1,128)}', space=vmem, size = 0x12000, scoped, tag = 'internal scratch']
  %s0 = inlined_call_operand.vmem [shape: f32[256,20], index: 0, kind: input, shape index: {}]
  %s1 = inlined_call_operand.vmem [shape: f32[40,20], index: 1, kind: input, shape index: {}]
  %s2 = inlined_call_operand.vmem [shape: f32[40,1], index: 2, kind: input, shape index: {}]
  %s3 = inlined_call_operand.vmem [shape: f32[24,40], index: 3, kind: input, shape index: {}]
  %s4 = inlined_call_operand.vmem [shape: f32[24,1], index: 4, kind: input, shape index: {}]
  %s5 = inlined_call_operand.vmem [shape: f32[8,24], index: 5, kind: input, shape index: {}]
  %s6 = inlined_call_operand.vmem [shape: f32[8,1], index: 6, kind: input, shape index: {}]
  %s7 = inlined_call_operand.vmem [shape: f32[24,8], index: 7, kind: input, shape index: {}]
  %s8 = inlined_call_operand.vmem [shape: f32[24,1], index: 8, kind: input, shape index: {}]
  %s9 = inlined_call_operand.vmem [shape: f32[40,24], index: 9, kind: input, shape index: {}]
  %s10 = inlined_call_operand.vmem [shape: f32[40,1], index: 10, kind: input, shape index: {}]
  %s11 = inlined_call_operand.vmem [shape: f32[24,40], index: 11, kind: input, shape index: {}]
  %s12 = inlined_call_operand.vmem [shape: f32[24,1], index: 12, kind: input, shape index: {}]
  %s13 = inlined_call_operand.vmem [shape: f32[256,4], index: 13, kind: output, shape index: {0}]
  %s14 = inlined_call_operand.vmem [shape: f32[256,20], index: 14, kind: output, shape index: {1}]
  %15 = xla_tuple %s13, %s14
  %s16 = sld [smem:[#allocation0]]
  $region93: #{tpu_custom_call.1} parent=0
    _
  %s18 = ssub.s32 1, %s16
  %s19 = scalar_select 0, %s18, %s16
  loop: start=0, step=1, limit=4
  $region2: #{tpu_custom_call.1} parent=0 // loop_pre_header
    _
  $region3: #{tpu_custom_call.1} parent=0 // loop_header
    %s21 = sphi 0, %s25
    %p22 = scmp.ge.s32.totalorder %s21, 4
    %s31 = sphi 0, %s33
    %s34 = sphi 0, %s31
    %s35 = sphi 0, %s34
    %s51 = sphi 0, %s35
    %s55 = sphi 0, %s55
    %s57 = sphi 0, %s55
    %s58 = sphi 0, %s57
    %s72 = sphi 0, %s58
    %s76 = sphi 0, %s76
    %s78 = sphi 0, %s76
    %s79 = sphi 0, %s78
    %s93 = sphi 0, %s79
    %s97 = sphi 0, %s97
    %s99 = sphi 0, %s97
    %s100 = sphi 0, %s99
    %s114 = sphi 0, %s100
    %s118 = sphi 0, %s118
    %s120 = sphi 0, %s118
    %s121 = sphi 0, %s120
    %s135 = sphi 0, %s121
    %s139 = sphi 0, %s139
    %s141 = sphi 0, %s139
    %s142 = sphi 0, %s141
    %s156 = sphi 0, %s142
    %s160 = sphi 0, %s160
    %s162 = sphi 0, %s160
    %s163 = sphi 0, %s162
    %s177 = sphi 0, %s163
    %s181 = sphi 0, %s181
    %s183 = sphi 0, %s181
    %s184 = sphi 0, %s183
    %s198 = sphi 0, %s184
    %s202 = sphi 0, %s202
    %s204 = sphi 0, %s202
    %s205 = sphi 0, %s204
    %s219 = sphi 0, %s205
    %s223 = sphi 0, %s223
    %s225 = sphi 0, %s223
    %s226 = sphi 0, %s225
    %s240 = sphi 0, %s226
    %s244 = sphi 0, %s244
    %s246 = sphi 0, %s244
    %s247 = sphi 0, %s246
    %s261 = sphi 0, %s247
    %s265 = sphi 0, %s265
    %s267 = sphi 0, %s265
    %s268 = sphi 0, %s267
    %s282 = sphi 0, %s268
    %s286 = sphi 0, %s286
    %s288 = sphi 0, %s286
    %s289 = sphi 0, %s288
    %s303 = sphi 0, %s289
    %s309 = sphi 0, %s311
    %s312 = sphi 0, %s309
    %s313 = sphi 0, %s312
    %s329 = sphi 0, %s313
    %s335 = sphi 0, %s337
    %s338 = sphi 0, %s335
    %s339 = sphi 0, %s338
    %s355 = sphi 0, %s339
  $region4: #{tpu_custom_call.1} parent=0 // loop_header_branch
    %24 = sbr.rel (%p22) target = $region8
  $region5: #{tpu_custom_call.1} parent=0 // loop_body
    %s26 = ssub.s32 %s21, 1
    %s27 = ssub.s32 %s21, 2
    %s28 = sadd.s32 %s21, 1
    %s29 = ssub.s32 %s21, %s28
    %p30 = scmp.eq.s32.totalorder %s29, 0
    %s32 = sadd.s32 %s31, 1
    %s33 = scalar_select %p30, %s31, %s32
    %p36 = pneg %p30
    %p37 = scmp.eq.s32.totalorder %s21, 1
    %p38 = por %p36, %p37
    %p39 = scmp.ne.s32.totalorder %s31, %s34
    %p40 = scmp.eq.s32.totalorder %s21, 0
    %p41 = por %p39, %p40
    %p42 = scmp.ne.s32.totalorder %s31, %s34
    %p43 = scmp.eq.s32.totalorder %s26, 1
    %p44 = por %p42, %p43
    %p45 = scmp.ne.s32.totalorder %s34, %s35
    %p46 = scmp.eq.s32.totalorder %s26, 0
    %p47 = por %p45, %p46
    %p48 = scmp.ne.s32.totalorder %s34, %s35
    %p49 = scmp.eq.s32.totalorder %s27, 1
    %p50 = por %p48, %p49
    %p52 = scmp.ne.s32.totalorder %s35, %s51
    %p53 = scmp.eq.s32.totalorder %s27, 0
    %p54 = por %p52, %p53
    %s56 = sadd.s32 %s55, 1
    %p59 = scmp.eq.s32.totalorder %s21, 1
    %p60 = scmp.ne.s32.totalorder %s55, %s57
    %p61 = scmp.eq.s32.totalorder %s21, 0
    %p62 = por %p60, %p61
    %p63 = scmp.ne.s32.totalorder %s55, %s57
    %p64 = scmp.eq.s32.totalorder %s26, 1
    %p65 = por %p63, %p64
    %p66 = scmp.ne.s32.totalorder %s57, %s58
    %p67 = scmp.eq.s32.totalorder %s26, 0
    %p68 = por %p66, %p67
    %p69 = scmp.ne.s32.totalorder %s57, %s58
    %p70 = scmp.eq.s32.totalorder %s27, 1
    %p71 = por %p69, %p70
    %p73 = scmp.ne.s32.totalorder %s58, %s72
    %p74 = scmp.eq.s32.totalorder %s27, 0
    %p75 = por %p73, %p74
    %s77 = sadd.s32 %s76, 1
    %p80 = scmp.eq.s32.totalorder %s21, 1
    %p81 = scmp.ne.s32.totalorder %s76, %s78
    %p82 = scmp.eq.s32.totalorder %s21, 0
    %p83 = por %p81, %p82
    %p84 = scmp.ne.s32.totalorder %s76, %s78
    %p85 = scmp.eq.s32.totalorder %s26, 1
    %p86 = por %p84, %p85
    %p87 = scmp.ne.s32.totalorder %s78, %s79
    %p88 = scmp.eq.s32.totalorder %s26, 0
    %p89 = por %p87, %p88
    %p90 = scmp.ne.s32.totalorder %s78, %s79
    %p91 = scmp.eq.s32.totalorder %s27, 1
    %p92 = por %p90, %p91
    %p94 = scmp.ne.s32.totalorder %s79, %s93
    %p95 = scmp.eq.s32.totalorder %s27, 0
    %p96 = por %p94, %p95
    %s98 = sadd.s32 %s97, 1
    %p101 = scmp.eq.s32.totalorder %s21, 1
    %p102 = scmp.ne.s32.totalorder %s97, %s99
    %p103 = scmp.eq.s32.totalorder %s21, 0
    %p104 = por %p102, %p103
    %p105 = scmp.ne.s32.totalorder %s97, %s99
    %p106 = scmp.eq.s32.totalorder %s26, 1
    %p107 = por %p105, %p106
    %p108 = scmp.ne.s32.totalorder %s99, %s100
    %p109 = scmp.eq.s32.totalorder %s26, 0
    %p110 = por %p108, %p109
    %p111 = scmp.ne.s32.totalorder %s99, %s100
    %p112 = scmp.eq.s32.totalorder %s27, 1
    %p113 = por %p111, %p112
    %p115 = scmp.ne.s32.totalorder %s100, %s114
    %p116 = scmp.eq.s32.totalorder %s27, 0
    %p117 = por %p115, %p116
    %s119 = sadd.s32 %s118, 1
    %p122 = scmp.eq.s32.totalorder %s21, 1
    %p123 = scmp.ne.s32.totalorder %s118, %s120
    %p124 = scmp.eq.s32.totalorder %s21, 0
    %p125 = por %p123, %p124
    %p126 = scmp.ne.s32.totalorder %s118, %s120
    %p127 = scmp.eq.s32.totalorder %s26, 1
    %p128 = por %p126, %p127
    %p129 = scmp.ne.s32.totalorder %s120, %s121
    %p130 = scmp.eq.s32.totalorder %s26, 0
    %p131 = por %p129, %p130
    %p132 = scmp.ne.s32.totalorder %s120, %s121
    %p133 = scmp.eq.s32.totalorder %s27, 1
    %p134 = por %p132, %p133
    %p136 = scmp.ne.s32.totalorder %s121, %s135
    %p137 = scmp.eq.s32.totalorder %s27, 0
    %p138 = por %p136, %p137
    %s140 = sadd.s32 %s139, 1
    %p143 = scmp.eq.s32.totalorder %s21, 1
    %p144 = scmp.ne.s32.totalorder %s139, %s141
    %p145 = scmp.eq.s32.totalorder %s21, 0
    %p146 = por %p144, %p145
    %p147 = scmp.ne.s32.totalorder %s139, %s141
    %p148 = scmp.eq.s32.totalorder %s26, 1
    %p149 = por %p147, %p148
    %p150 = scmp.ne.s32.totalorder %s141, %s142
    %p151 = scmp.eq.s32.totalorder %s26, 0
    %p152 = por %p150, %p151
    %p153 = scmp.ne.s32.totalorder %s141, %s142
    %p154 = scmp.eq.s32.totalorder %s27, 1
    %p155 = por %p153, %p154
    %p157 = scmp.ne.s32.totalorder %s142, %s156
    %p158 = scmp.eq.s32.totalorder %s27, 0
    %p159 = por %p157, %p158
    %s161 = sadd.s32 %s160, 1
    %p164 = scmp.eq.s32.totalorder %s21, 1
    %p165 = scmp.ne.s32.totalorder %s160, %s162
    %p166 = scmp.eq.s32.totalorder %s21, 0
    %p167 = por %p165, %p166
    %p168 = scmp.ne.s32.totalorder %s160, %s162
    %p169 = scmp.eq.s32.totalorder %s26, 1
    %p170 = por %p168, %p169
    %p171 = scmp.ne.s32.totalorder %s162, %s163
    %p172 = scmp.eq.s32.totalorder %s26, 0
    %p173 = por %p171, %p172
    %p174 = scmp.ne.s32.totalorder %s162, %s163
    %p175 = scmp.eq.s32.totalorder %s27, 1
    %p176 = por %p174, %p175
    %p178 = scmp.ne.s32.totalorder %s163, %s177
    %p179 = scmp.eq.s32.totalorder %s27, 0
    %p180 = por %p178, %p179
    %s182 = sadd.s32 %s181, 1
    %p185 = scmp.eq.s32.totalorder %s21, 1
    %p186 = scmp.ne.s32.totalorder %s181, %s183
    %p187 = scmp.eq.s32.totalorder %s21, 0
    %p188 = por %p186, %p187
    %p189 = scmp.ne.s32.totalorder %s181, %s183
    %p190 = scmp.eq.s32.totalorder %s26, 1
    %p191 = por %p189, %p190
    %p192 = scmp.ne.s32.totalorder %s183, %s184
    %p193 = scmp.eq.s32.totalorder %s26, 0
    %p194 = por %p192, %p193
    %p195 = scmp.ne.s32.totalorder %s183, %s184
    %p196 = scmp.eq.s32.totalorder %s27, 1
    %p197 = por %p195, %p196
    %p199 = scmp.ne.s32.totalorder %s184, %s198
    %p200 = scmp.eq.s32.totalorder %s27, 0
    %p201 = por %p199, %p200
    %s203 = sadd.s32 %s202, 1
    %p206 = scmp.eq.s32.totalorder %s21, 1
    %p207 = scmp.ne.s32.totalorder %s202, %s204
    %p208 = scmp.eq.s32.totalorder %s21, 0
    %p209 = por %p207, %p208
    %p210 = scmp.ne.s32.totalorder %s202, %s204
    %p211 = scmp.eq.s32.totalorder %s26, 1
    %p212 = por %p210, %p211
    %p213 = scmp.ne.s32.totalorder %s204, %s205
    %p214 = scmp.eq.s32.totalorder %s26, 0
    %p215 = por %p213, %p214
    %p216 = scmp.ne.s32.totalorder %s204, %s205
    %p217 = scmp.eq.s32.totalorder %s27, 1
    %p218 = por %p216, %p217
    %p220 = scmp.ne.s32.totalorder %s205, %s219
    %p221 = scmp.eq.s32.totalorder %s27, 0
    %p222 = por %p220, %p221
    %s224 = sadd.s32 %s223, 1
    %p227 = scmp.eq.s32.totalorder %s21, 1
    %p228 = scmp.ne.s32.totalorder %s223, %s225
    %p229 = scmp.eq.s32.totalorder %s21, 0
    %p230 = por %p228, %p229
    %p231 = scmp.ne.s32.totalorder %s223, %s225
    %p232 = scmp.eq.s32.totalorder %s26, 1
    %p233 = por %p231, %p232
    %p234 = scmp.ne.s32.totalorder %s225, %s226
    %p235 = scmp.eq.s32.totalorder %s26, 0
    %p236 = por %p234, %p235
    %p237 = scmp.ne.s32.totalorder %s225, %s226
    %p238 = scmp.eq.s32.totalorder %s27, 1
    %p239 = por %p237, %p238
    %p241 = scmp.ne.s32.totalorder %s226, %s240
    %p242 = scmp.eq.s32.totalorder %s27, 0
    %p243 = por %p241, %p242
    %s245 = sadd.s32 %s244, 1
    %p248 = scmp.eq.s32.totalorder %s21, 1
    %p249 = scmp.ne.s32.totalorder %s244, %s246
    %p250 = scmp.eq.s32.totalorder %s21, 0
    %p251 = por %p249, %p250
    %p252 = scmp.ne.s32.totalorder %s244, %s246
    %p253 = scmp.eq.s32.totalorder %s26, 1
    %p254 = por %p252, %p253
    %p255 = scmp.ne.s32.totalorder %s246, %s247
    %p256 = scmp.eq.s32.totalorder %s26, 0
    %p257 = por %p255, %p256
    %p258 = scmp.ne.s32.totalorder %s246, %s247
    %p259 = scmp.eq.s32.totalorder %s27, 1
    %p260 = por %p258, %p259
    %p262 = scmp.ne.s32.totalorder %s247, %s261
    %p263 = scmp.eq.s32.totalorder %s27, 0
    %p264 = por %p262, %p263
    %s266 = sadd.s32 %s265, 1
    %p269 = scmp.eq.s32.totalorder %s21, 1
    %p270 = scmp.ne.s32.totalorder %s265, %s267
    %p271 = scmp.eq.s32.totalorder %s21, 0
    %p272 = por %p270, %p271
    %p273 = scmp.ne.s32.totalorder %s265, %s267
    %p274 = scmp.eq.s32.totalorder %s26, 1
    %p275 = por %p273, %p274
    %p276 = scmp.ne.s32.totalorder %s267, %s268
    %p277 = scmp.eq.s32.totalorder %s26, 0
    %p278 = por %p276, %p277
    %p279 = scmp.ne.s32.totalorder %s267, %s268
    %p280 = scmp.eq.s32.totalorder %s27, 1
    %p281 = por %p279, %p280
    %p283 = scmp.ne.s32.totalorder %s268, %s282
    %p284 = scmp.eq.s32.totalorder %s27, 0
    %p285 = por %p283, %p284
    %s287 = sadd.s32 %s286, 1
    %p290 = scmp.eq.s32.totalorder %s21, 1
    %p291 = scmp.ne.s32.totalorder %s286, %s288
    %p292 = scmp.eq.s32.totalorder %s21, 0
    %p293 = por %p291, %p292
    %p294 = scmp.ne.s32.totalorder %s286, %s288
    %p295 = scmp.eq.s32.totalorder %s26, 1
    %p296 = por %p294, %p295
    %p297 = scmp.ne.s32.totalorder %s288, %s289
    %p298 = scmp.eq.s32.totalorder %s26, 0
    %p299 = por %p297, %p298
    %p300 = scmp.ne.s32.totalorder %s288, %s289
    %p301 = scmp.eq.s32.totalorder %s27, 1
    %p302 = por %p300, %p301
    %p304 = scmp.ne.s32.totalorder %s289, %s303
    %p305 = scmp.eq.s32.totalorder %s27, 0
    %p306 = por %p304, %p305
    %s307 = ssub.s32 %s21, %s28
    %p308 = scmp.eq.s32.totalorder %s307, 0
    %s310 = sadd.s32 %s309, 1
    %s311 = scalar_select %p308, %s309, %s310
    %p314 = pneg %p308
    %p315 = scmp.eq.s32.totalorder %s21, 1
    %p316 = por %p314, %p315
    %p317 = scmp.ne.s32.totalorder %s309, %s312
    %p318 = scmp.eq.s32.totalorder %s21, 0
    %p319 = por %p317, %p318
    %p320 = scmp.ne.s32.totalorder %s309, %s312
    %p321 = scmp.eq.s32.totalorder %s26, 1
    %p322 = por %p320, %p321
    %p323 = scmp.ne.s32.totalorder %s312, %s313
    %p324 = scmp.eq.s32.totalorder %s26, 0
    %p325 = por %p323, %p324
    %p326 = scmp.ne.s32.totalorder %s312, %s313
    %p327 = scmp.eq.s32.totalorder %s27, 1
    %p328 = por %p326, %p327
    %p330 = scmp.ne.s32.totalorder %s313, %s329
    %p331 = scmp.eq.s32.totalorder %s27, 0
    %p332 = por %p330, %p331
    %s333 = ssub.s32 %s21, %s28
    %p334 = scmp.eq.s32.totalorder %s333, 0
    %s336 = sadd.s32 %s335, 1
    %s337 = scalar_select %p334, %s335, %s336
    %p340 = pneg %p334
    %p341 = scmp.eq.s32.totalorder %s21, 1
    %p342 = por %p340, %p341
    %p343 = scmp.ne.s32.totalorder %s335, %s338
    %p344 = scmp.eq.s32.totalorder %s21, 0
    %p345 = por %p343, %p344
    %p346 = scmp.ne.s32.totalorder %s335, %s338
    %p347 = scmp.eq.s32.totalorder %s26, 1
    %p348 = por %p346, %p347
    %p349 = scmp.ne.s32.totalorder %s338, %s339
    %p350 = scmp.eq.s32.totalorder %s26, 0
    %p351 = por %p349, %p350
    %p352 = scmp.ne.s32.totalorder %s338, %s339
    %p353 = scmp.eq.s32.totalorder %s27, 1
    %p354 = por %p352, %p353
    %p356 = scmp.ne.s32.totalorder %s339, %s355
    %p357 = scmp.eq.s32.totalorder %s27, 0
    %p358 = por %p356, %p357
    %p359 = scmp.le.s32.totalorder 1, %s21
    %p360 = scmp.lt.s32.totalorder %s21, 3
    %p361 = pnand %p359, %p360
    %p362 = pneg %p361
    // Predicated region
    $region9: #{tpu_custom_call.1} parent=5 // pred_check
      _
    $region10: #{tpu_custom_call.1} parent=5 // pred_check_branch
      %364 = sbr.rel (%p361) target = $region12
    $region11: #{tpu_custom_call.1} parent=5 // pred_region
      %s365 = ssub.s32 %s21, 1
      // Predicated region
      $region13: #{tpu_custom_call.1} parent=11 // pred_check
        %p366 = pneg %p68
      $region14: #{tpu_custom_call.1} parent=11 // pred_check_branch
        %368 = sbr.rel (%p366) target = $region16
      $region15: #{tpu_custom_call.1} parent=11 // pred_region
        _
      $region16: #{tpu_custom_call.1} parent=11 // pred_fallthru
        _
      // Predicated region
      $region17: #{tpu_custom_call.1} parent=11 // pred_check
        %p369 = pneg %p89
      $region18: #{tpu_custom_call.1} parent=11 // pred_check_branch
        %371 = sbr.rel (%p369) target = $region20
      $region19: #{tpu_custom_call.1} parent=11 // pred_region
        _
      $region20: #{tpu_custom_call.1} parent=11 // pred_fallthru
        _
      // Predicated region
      $region21: #{tpu_custom_call.1} parent=11 // pred_check
        %p372 = pneg %p110
      $region22: #{tpu_custom_call.1} parent=11 // pred_check_branch
        %374 = sbr.rel (%p372) target = $region24
      $region23: #{tpu_custom_call.1} parent=11 // pred_region
        _
      $region24: #{tpu_custom_call.1} parent=11 // pred_fallthru
        _
      // Predicated region
      $region25: #{tpu_custom_call.1} parent=11 // pred_check
        %p375 = pneg %p131
      $region26: #{tpu_custom_call.1} parent=11 // pred_check_branch
        %377 = sbr.rel (%p375) target = $region28
      $region27: #{tpu_custom_call.1} parent=11 // pred_region
        _
      $region28: #{tpu_custom_call.1} parent=11 // pred_fallthru
        _
      // Predicated region
      $region29: #{tpu_custom_call.1} parent=11 // pred_check
        %p378 = pneg %p152
      $region30: #{tpu_custom_call.1} parent=11 // pred_check_branch
        %380 = sbr.rel (%p378) target = $region32
      $region31: #{tpu_custom_call.1} parent=11 // pred_region
        _
      $region32: #{tpu_custom_call.1} parent=11 // pred_fallthru
        _
      // Predicated region
      $region33: #{tpu_custom_call.1} parent=11 // pred_check
        %p381 = pneg %p173
      $region34: #{tpu_custom_call.1} parent=11 // pred_check_branch
        %383 = sbr.rel (%p381) target = $region36
      $region35: #{tpu_custom_call.1} parent=11 // pred_region
        _
      $region36: #{tpu_custom_call.1} parent=11 // pred_fallthru
        _
      // Predicated region
      $region37: #{tpu_custom_call.1} parent=11 // pred_check
        %p384 = pneg %p194
      $region38: #{tpu_custom_call.1} parent=11 // pred_check_branch
        %386 = sbr.rel (%p384) target = $region40
      $region39: #{tpu_custom_call.1} parent=11 // pred_region
        _
      $region40: #{tpu_custom_call.1} parent=11 // pred_fallthru
        _
      // Predicated region
      $region41: #{tpu_custom_call.1} parent=11 // pred_check
        %p387 = pneg %p215
      $region42: #{tpu_custom_call.1} parent=11 // pred_check_branch
        %389 = sbr.rel (%p387) target = $region44
      $region43: #{tpu_custom_call.1} parent=11 // pred_region
        _
      $region44: #{tpu_custom_call.1} parent=11 // pred_fallthru
        _
      // Predicated region
      $region45: #{tpu_custom_call.1} parent=11 // pred_check
        %p390 = pneg %p236
      $region46: #{tpu_custom_call.1} parent=11 // pred_check_branch
        %392 = sbr.rel (%p390) target = $region48
      $region47: #{tpu_custom_call.1} parent=11 // pred_region
        _
      $region48: #{tpu_custom_call.1} parent=11 // pred_fallthru
        _
      // Predicated region
      $region49: #{tpu_custom_call.1} parent=11 // pred_check
        %p393 = pneg %p257
      $region50: #{tpu_custom_call.1} parent=11 // pred_check_branch
        %395 = sbr.rel (%p393) target = $region52
      $region51: #{tpu_custom_call.1} parent=11 // pred_region
        _
      $region52: #{tpu_custom_call.1} parent=11 // pred_fallthru
        _
      // Predicated region
      $region53: #{tpu_custom_call.1} parent=11 // pred_check
        %p396 = pneg %p278
      $region54: #{tpu_custom_call.1} parent=11 // pred_check_branch
        %398 = sbr.rel (%p396) target = $region56
      $region55: #{tpu_custom_call.1} parent=11 // pred_region
        _
      $region56: #{tpu_custom_call.1} parent=11 // pred_fallthru
        _
      // Predicated region
      $region57: #{tpu_custom_call.1} parent=11 // pred_check
        %p399 = pneg %p299
      $region58: #{tpu_custom_call.1} parent=11 // pred_check_branch
        %401 = sbr.rel (%p399) target = $region60
      $region59: #{tpu_custom_call.1} parent=11 // pred_region
        _
      $region60: #{tpu_custom_call.1} parent=11 // pred_fallthru
        _
    $region12: #{tpu_custom_call.1} parent=5 // pred_fallthru
      _
    %p402 = scmp.lt.s32.totalorder %s21, 2
    // Predicated region
    $region61: #{tpu_custom_call.1} parent=5 // pred_check
      %p403 = pneg %p402
    $region62: #{tpu_custom_call.1} parent=5 // pred_check_branch
      %405 = sbr.rel (%p403) target = $region64
    $region63: #{tpu_custom_call.1} parent=5 // pred_region
      // Predicated region
      $region65: #{tpu_custom_call.1} parent=63 // pred_check
        %p406 = pneg %p41
      $region66: #{tpu_custom_call.1} parent=63 // pred_check_branch
        %408 = sbr.rel (%p406) target = $region68
      $region67: #{tpu_custom_call.1} parent=63 // pred_region
        %s409 = smul.u32 16, %s21
        %p410 = scmp.lt.s32.totalorder %s409, 31
        %s411 = scalar_select %p410, %s409, 31
        %s412 = smul.addr %s411, 8
        %s413 = scalar_lea.vmem %s0, %s412
        %s414 = smul.u32 16, %s21
      $region68: #{tpu_custom_call.1} parent=63 // pred_fallthru
        _
    $region64: #{tpu_custom_call.1} parent=5 // pred_fallthru
      _
    %p415 = scmp.le.s32.totalorder 1, %s21
    %p416 = scmp.lt.s32.totalorder %s21, 3
    %p417 = pnand %p415, %p416
    %p418 = pneg %p417
    // Predicated region
    $region69: #{tpu_custom_call.1} parent=5 // pred_check
      _
    $region70: #{tpu_custom_call.1} parent=5 // pred_check_branch
      %420 = sbr.rel (%p417) target = $region72
    $region71: #{tpu_custom_call.1} parent=5 // pred_region
      %s421 = ssub.s32 %s21, 1
      %s422 = smul.u32 16, %s26
      %p423 = scmp.lt.s32.totalorder %s422, 31
      %s424 = scalar_select %p423, %s422, 31
      %s425 = smul.addr %s424, 8
      %s426 = scalar_lea.vmem %s0, %s425
      %p427 = pneg %p47
      %p428 = pneg %p44
      %p429 = pneg %p68
      %p430 = pneg %p65
      %p431 = pneg %p89
      %p432 = pneg %p86
      %p433 = pneg %p110
      %p434 = pneg %p107
      %p435 = pneg %p131
      %p436 = pneg %p128
      %p437 = pneg %p152
      %p438 = pneg %p149
      %p439 = pneg %p173
      %p440 = pneg %p170
      %p441 = pneg %p194
      %p442 = pneg %p191
      %p443 = pneg %p215
      %p444 = pneg %p212
      %p445 = pneg %p236
      %p446 = pneg %p233
      %p447 = pneg %p257
      %p448 = pneg %p254
      %p449 = pneg %p278
      %p450 = pneg %p275
      %p451 = pneg %p299
      %p452 = pneg %p296
      %p453 = pneg %p325
      %p454 = pneg %p322
      %s455 = smul.u32 16, %s26
      %p456 = scmp.lt.s32.totalorder %s455, 31
      %s457 = scalar_select %p456, %s455, 31
      %s458 = smul.addr %s457, 8
      %s459 = scalar_lea.vmem %s13, %s458
      %p460 = pneg %p351
      %p461 = pneg %p348
      %s462 = smul.u32 16, %s26
      %p463 = scmp.lt.s32.totalorder %s462, 31
      %s464 = scalar_select %p463, %s462, 31
      %s465 = smul.addr %s464, 8
      %s466 = scalar_lea.vmem %s14, %s465
      %s467 = smul.u32 16, %s26
      %p468 = scmp.lt.s32.totalorder %s467, 31
      %s469 = scalar_select %p468, %s467, 31
      %s470 = smul.addr %s469, 8
      %s471 = scalar_lea.vmem %s0, %s470
      %s472 = smul.u32 16, %s26
      %s473 = smul.u32 16, %s26
      %p474 = scmp.lt.s32.totalorder %s473, 31
      %s475 = scalar_select %p474, %s473, 31
      %s476 = smul.addr %s475, 8
      %s477 = scalar_lea.vmem %s13, %s476
      %s478 = smul.u32 16, %s26
      %s479 = smul.u32 16, %s26
      %p480 = scmp.lt.s32.totalorder %s479, 31
      %s481 = scalar_select %p480, %s479, 31
      %s482 = smul.addr %s481, 8
      %s483 = scalar_lea.vmem %s14, %s482
      %s484 = smul.u32 16, %s26
      %v485 = vld [vmem:[%s471] sm:$0xff]
      %v486 = vld [vmem:[%s471 + $0x8] sm:$0xff]
      %v487 = vld [vmem:[%s471 + $0x10] sm:$0xff]
      %v488 = vld [vmem:[%s471 + $0x18] sm:$0xff]
      %v489 = vld [vmem:[%s471 + $0x20] sm:$0xff]
      %v490 = vld [vmem:[%s471 + $0x28] sm:$0xff]
      %v491 = vld [vmem:[%s471 + $0x30] sm:$0xff]
      %v492 = vld [vmem:[%s471 + $0x38] sm:$0xff]
      %v493 = vld [vmem:[%s471 + $0x40] sm:$0xff]
      %v494 = vld [vmem:[%s471 + $0x48] sm:$0xff]
      %v495 = vld [vmem:[%s471 + $0x50] sm:$0xff]
      %v496 = vld [vmem:[%s471 + $0x58] sm:$0xff]
      %v497 = vld [vmem:[%s471 + $0x60] sm:$0xff]
      %v498 = vld [vmem:[%s471 + $0x68] sm:$0xff]
      %v499 = vld [vmem:[%s471 + $0x70] sm:$0xff]
      %v500 = vld [vmem:[%s471 + $0x78] sm:$0xff]
      %v501 = vld [vmem:[%s1] sm:$0xff]
      %v502 = vld [vmem:[%s1 + $0x8] sm:$0xff]
      %v503 = vld [vmem:[%s1 + $0x10] sm:$0xff]
      %v504 = vld [vmem:[%s1 + $0x18] sm:$0xff]
      %v505 = vld [vmem:[%s1 + $0x20] sm:$0xff]
      %v506 = vld [vmem:[%s2] sm:$0xff]
      %v507 = vld [vmem:[%s2 + $0x8] sm:$0xff]
      %v508 = vld [vmem:[%s2 + $0x10] sm:$0xff]
      %v509 = vld [vmem:[%s2 + $0x18] sm:$0xff]
      %v510 = vld [vmem:[%s2 + $0x20] sm:$0xff]
      %512 = vset.pattern.permute.xlu0 0
      %513 = vperm.xlu0 %512, %v506
      %v514 = vpop.permute.xlu0 %513
      %517 = vset.pattern.permute.xlu0 0
      %518 = vperm.xlu0 %517, %v507
      %v519 = vpop.permute.xlu0 %518
      %522 = vset.pattern.permute.xlu0 0
      %523 = vperm.xlu0 %522, %v508
      %v524 = vpop.permute.xlu0 %523
      %527 = vset.pattern.permute.xlu0 0
      %528 = vperm.xlu0 %527, %v509
      %v529 = vpop.permute.xlu0 %528
      %532 = vset.pattern.permute.xlu0 0
      %533 = vperm.xlu0 %532, %v510
      %v534 = vpop.permute.xlu0 %533
      %vm536 = vcmask 162816
      %v538 = vsel %vm536, %v501, 0
      %v541 = vsel %vm536, %v502, 0
      %v544 = vsel %vm536, %v503, 0
      %v547 = vsel %vm536, %v504, 0
      %v550 = vsel %vm536, %v505, 0
      %v553 = vsel %vm536, %v485, 0
      %v556 = vsel %vm536, %v486, 0
      %v559 = vsel %vm536, %v487, 0
      %v562 = vsel %vm536, %v488, 0
      %v565 = vsel %vm536, %v489, 0
      %v568 = vsel %vm536, %v490, 0
      %v571 = vsel %vm536, %v491, 0
      %v574 = vsel %vm536, %v492, 0
      %v577 = vsel %vm536, %v493, 0
      %v580 = vsel %vm536, %v494, 0
      %v583 = vsel %vm536, %v495, 0
      %v586 = vsel %vm536, %v496, 0
      %v589 = vsel %vm536, %v497, 0
      %v592 = vsel %vm536, %v498, 0
      %v595 = vsel %vm536, %v499, 0
      %v598 = vsel %vm536, %v500, 0
      %600 = vmatprep.subr.mxu0 0.0
      %601 = vmatpush1.xpose.msra.mxu0 %v553
      %602 = vmatprep.subr.mxu0 0.0
      %603 = vmatpush1.xpose.msra.mxu0 %v556
      %604 = vmatprep.subr.mxu0 0.0
      %605 = vmatpush1.xpose.msra.mxu0 %v559
      %606 = vmatprep.subr.mxu0 0.0
      %607 = vmatpush1.xpose.msra.mxu0 %v562
      %608 = vmatprep.subr.mxu0 0.0
      %609 = vmatpush1.xpose.msra.mxu0 %v565
      %610 = vmatprep.subr.mxu0 0.0
      %611 = vmatpush1.xpose.msra.mxu0 %v568
      %612 = vmatprep.subr.mxu0 0.0
      %613 = vmatpush1.xpose.msra.mxu0 %v571
      %614 = vmatprep.subr.mxu0 0.0
      %615 = vmatpush1.xpose.msra.mxu0 %v574
      %616 = vmatprep.subr.mxu0 0.0
      %617 = vmatpush1.xpose.msra.mxu0 %v577
      %618 = vmatprep.subr.mxu0 0.0
      %619 = vmatpush1.xpose.msra.mxu0 %v580
      %620 = vmatprep.subr.mxu0 0.0
      %621 = vmatpush1.xpose.msra.mxu0 %v583
      %622 = vmatprep.subr.mxu0 0.0
      %623 = vmatpush1.xpose.msra.mxu0 %v586
      %624 = vmatprep.subr.mxu0 0.0
      %625 = vmatpush1.xpose.msra.mxu0 %v589
      %626 = vmatprep.subr.mxu0 0.0
      %627 = vmatpush1.xpose.msra.mxu0 %v592
      %628 = vmatprep.subr.mxu0 0.0
      %629 = vmatpush1.xpose.msra.mxu0 %v595
      %630 = vmatprep.subr.mxu0 0.0
      %631 = vmatpush1.xpose.msra.mxu0 %v598
      %632 = vmatprep.subr.mxu0 0.0
      %633 = vmatpush1.xpose.msra.mxu0 0.0
      %634 = vmatprep.subr.mxu0 0.0
      %635 = vmatpush1.xpose.msra.mxu0 0.0
      %636 = vmatprep.subr.mxu0 0.0
      %637 = vmatpush1.xpose.msra.mxu0 0.0
      %638 = vmatprep.subr.mxu0 0.0
      %639 = vmatpush1.xpose.msra.mxu0 0.0
      %640 = vmatprep.subr.mxu0 0.0
      %641 = vmatpush1.xpose.msra.mxu0 0.0
      %642 = vmatprep.subr.mxu0 0.0
      %643 = vmatpush1.xpose.msra.mxu0 0.0
      %644 = vmatprep.subr.mxu0 0.0
      %645 = vmatpush1.xpose.msra.mxu0 0.0
      %646 = vmatprep.subr.mxu0 0.0
      %647 = vmatpush1.xpose.msra.mxu0 0.0
      %648 = vmatprep.subr.mxu0 0.0
      %649 = vmatpush1.xpose.msra.mxu0 0.0
      %650 = vmatprep.subr.mxu0 0.0
      %651 = vmatpush1.xpose.msra.mxu0 0.0
      %652 = vmatprep.subr.mxu0 0.0
      %653 = vmatpush1.xpose.msra.mxu0 0.0
      %654 = vmatprep.subr.mxu0 0.0
      %655 = vmatpush1.xpose.msra.mxu0 0.0
      %656 = vmatprep.subr.mxu0 0.0
      %657 = vmatpush1.xpose.msra.mxu0 0.0
      %658 = vmatprep.subr.mxu0 0.0
      %659 = vmatpush1.xpose.msra.mxu0 0.0
      %660 = vmatprep.subr.mxu0 0.0
      %661 = vmatpush1.xpose.msra.mxu0 0.0
      %662 = vmatprep.subr.mxu0 0.0
      %663 = vmatpush1.xpose.msra.mxu0 0.0
      %664 = vmatprep.mubr.f32.mxu0 0.0
      %665 = vmatmul.mubr.f32.gmra.mrb[0].mxu0 %v538
      %v666 = vpop.f32.mrb[0].mxu0
      %v667 = vadd.f32 %v514, %v666
      %v668 = vpop.f32.mrb[0].mxu0
      %669 = vmatprep.mubr.f32.mxu0 0.0
      %670 = vmatmul.mubr.f32.gmra.mrb[0].mxu0 %v541
      %v671 = vpop.f32.mrb[0].mxu0
      %v672 = vadd.f32 %v519, %v671
      %v673 = vpop.f32.mrb[0].mxu0
      %674 = vmatprep.mubr.f32.mxu0 0.0
      %675 = vmatmul.mubr.f32.gmra.mrb[0].mxu0 %v544
      %v676 = vpop.f32.mrb[0].mxu0
      %v677 = vadd.f32 %v524, %v676
      %v678 = vpop.f32.mrb[0].mxu0
      %679 = vmatprep.mubr.f32.mxu0 0.0
      %680 = vmatmul.mubr.f32.gmra.mrb[0].mxu0 %v547
      %v681 = vpop.f32.mrb[0].mxu0
      %v682 = vadd.f32 %v529, %v681
      %v683 = vpop.f32.mrb[0].mxu0
      %684 = vmatprep.mubr.f32.mxu0 0.0
      %685 = vmatmul.mubr.f32.gmra.mrb[0].mxu0 %v550
      %v686 = vpop.f32.mrb[0].mxu0
      %v687 = vadd.f32 %v534, %v686
      %v688 = vpop.f32.mrb[0].mxu0
      %689 = vdwg.mxu0
      %v690 = vtanh.pop %v667
      %v691 = vtanh.pop %v672
      %v692 = vtanh.pop %v677
      %v693 = vtanh.pop %v682
      %v694 = vtanh.pop %v687
      %v695 = vld [vmem:[%s3] sm:$0xff]
      %v696 = vld [vmem:[%s3 + $0x8] sm:$0xff]
      %v697 = vld [vmem:[%s3 + $0x10] sm:$0xff]
      %v698 = vld [vmem:[%s4] sm:$0xff]
      %v699 = vld [vmem:[%s4 + $0x8] sm:$0xff]
      %v700 = vld [vmem:[%s4 + $0x10] sm:$0xff]
      %702 = vset.pattern.permute.xlu0 0
      %703 = vperm.xlu0 %702, %v698
      %v704 = vpop.permute.xlu0 %703
      %707 = vset.pattern.permute.xlu0 0
      %708 = vperm.xlu0 %707, %v699
      %v709 = vpop.permute.xlu0 %708
      %712 = vset.pattern.permute.xlu0 0
      %713 = vperm.xlu0 %712, %v700
      %v714 = vpop.permute.xlu0 %713
      %vm716 = vcmask 326656
      %v718 = vsel %vm716, %v695, 0
      %v721 = vsel %vm716, %v696, 0
      %v724 = vsel %vm716, %v697, 0
      %726 = vmatprep.subr.mxu0 0.0
      %727 = vmatpush1.msra.mxu0 %v690
      %728 = vmatprep.subr.mxu0 0.0
      %729 = vmatpush1.msra.mxu0 %v691
      %730 = vmatprep.subr.mxu0 0.0
      %731 = vmatpush1.msra.mxu0 %v692
      %732 = vmatprep.subr.mxu0 0.0
      %733 = vmatpush1.msra.mxu0 %v693
      %734 = vmatprep.subr.mxu0 0.0
      %735 = vmatpush1.msra.mxu0 %v694
      %736 = vmatprep.subr.mxu0 0.0
      %737 = vmatpush1.msra.mxu0 0.0
      %738 = vmatprep.subr.mxu0 0.0
      %739 = vmatpush1.msra.mxu0 0.0
      %740 = vmatprep.subr.mxu0 0.0
      %741 = vmatpush1.msra.mxu0 0.0
      %742 = vmatprep.subr.mxu0 0.0
      %743 = vmatpush1.msra.mxu0 0.0
      %744 = vmatprep.subr.mxu0 0.0
      %745 = vmatpush1.msra.mxu0 0.0
      %746 = vmatprep.subr.mxu0 0.0
      %747 = vmatpush1.msra.mxu0 0.0
      %748 = vmatprep.subr.mxu0 0.0
      %749 = vmatpush1.msra.mxu0 0.0
      %750 = vmatprep.subr.mxu0 0.0
      %751 = vmatpush1.msra.mxu0 0.0
      %752 = vmatprep.subr.mxu0 0.0
      %753 = vmatpush1.msra.mxu0 0.0
      %754 = vmatprep.subr.mxu0 0.0
      %755 = vmatpush1.msra.mxu0 0.0
      %756 = vmatprep.subr.mxu0 0.0
      %757 = vmatpush1.msra.mxu0 0.0
      %758 = vmatprep.subr.mxu0 0.0
      %759 = vmatpush1.msra.mxu0 0.0
      %760 = vmatprep.subr.mxu0 0.0
      %761 = vmatpush1.msra.mxu0 0.0
      %762 = vmatprep.subr.mxu0 0.0
      %763 = vmatpush1.msra.mxu0 0.0
      %764 = vmatprep.subr.mxu0 0.0
      %765 = vmatpush1.msra.mxu0 0.0
      %766 = vmatprep.subr.mxu0 0.0
      %767 = vmatpush1.msra.mxu0 0.0
      %768 = vmatprep.subr.mxu0 0.0
      %769 = vmatpush1.msra.mxu0 0.0
      %770 = vmatprep.subr.mxu0 0.0
      %771 = vmatpush1.msra.mxu0 0.0
      %772 = vmatprep.subr.mxu0 0.0
      %773 = vmatpush1.msra.mxu0 0.0
      %774 = vmatprep.subr.mxu0 0.0
      %775 = vmatpush1.msra.mxu0 0.0
      %776 = vmatprep.subr.mxu0 0.0
      %777 = vmatpush1.msra.mxu0 0.0
      %778 = vmatprep.subr.mxu0 0.0
      %779 = vmatpush1.msra.mxu0 0.0
      %780 = vmatprep.subr.mxu0 0.0
      %781 = vmatpush1.msra.mxu0 0.0
      %782 = vmatprep.subr.mxu0 0.0
      %783 = vmatpush1.msra.mxu0 0.0
      %784 = vmatprep.subr.mxu0 0.0
      %785 = vmatpush1.msra.mxu0 0.0
      %786 = vmatprep.subr.mxu0 0.0
      %787 = vmatpush1.msra.mxu0 0.0
      %788 = vmatprep.subr.mxu0 0.0
      %789 = vmatpush1.msra.mxu0 0.0
      %790 = vmatprep.mubr.f32.mxu0 0.0
      %791 = vmatmul.mubr.f32.gmra.mrb[0].mxu0 %v718
      %v792 = vpop.f32.mrb[0].mxu0
      %v793 = vadd.f32 %v704, %v792
      %v794 = vpop.f32.mrb[0].mxu0
      %795 = vmatprep.mubr.f32.mxu0 0.0
      %796 = vmatmul.mubr.f32.gmra.mrb[0].mxu0 %v721
      %v797 = vpop.f32.mrb[0].mxu0
      %v798 = vadd.f32 %v709, %v797
      %v799 = vpop.f32.mrb[0].mxu0
      %800 = vmatprep.mubr.f32.mxu0 0.0
      %801 = vmatmul.mubr.f32.gmra.mrb[0].mxu0 %v724
      %v802 = vpop.f32.mrb[0].mxu0
      %v803 = vadd.f32 %v714, %v802
      %v804 = vpop.f32.mrb[0].mxu0
      %805 = vdwg.mxu0
      %v806 = vtanh.pop %v793
      %v807 = vtanh.pop %v798
      %v808 = vtanh.pop %v803
      %v809 = vld [vmem:[%s5] sm:$0xff]
      %v810 = vld [vmem:[%s6] sm:$0xff]
      %812 = vset.pattern.permute.xlu0 0
      %813 = vperm.xlu0 %812, %v810
      %v814 = vpop.permute.xlu0 %813
      %vm816 = vcmask 195584
      %v818 = vsel %vm816, %v809, 0
      %820 = vmatprep.subr.mxu0 0.0
      %821 = vmatpush1.msra.mxu0 %v806
      %822 = vmatprep.subr.mxu0 0.0
      %823 = vmatpush1.msra.mxu0 %v807
      %824 = vmatprep.subr.mxu0 0.0
      %825 = vmatpush1.msra.mxu0 %v808
      %826 = vmatprep.subr.mxu0 0.0
      %827 = vmatpush1.msra.mxu0 0.0
      %828 = vmatprep.subr.mxu0 0.0
      %829 = vmatpush1.msra.mxu0 0.0
      %830 = vmatprep.subr.mxu0 0.0
      %831 = vmatpush1.msra.mxu0 0.0
      %832 = vmatprep.subr.mxu0 0.0
      %833 = vmatpush1.msra.mxu0 0.0
      %834 = vmatprep.subr.mxu0 0.0
      %835 = vmatpush1.msra.mxu0 0.0
      %836 = vmatprep.subr.mxu0 0.0
      %837 = vmatpush1.msra.mxu0 0.0
      %838 = vmatprep.subr.mxu0 0.0
      %839 = vmatpush1.msra.mxu0 0.0
      %840 = vmatprep.subr.mxu0 0.0
      %841 = vmatpush1.msra.mxu0 0.0
      %842 = vmatprep.subr.mxu0 0.0
      %843 = vmatpush1.msra.mxu0 0.0
      %844 = vmatprep.subr.mxu0 0.0
      %845 = vmatpush1.msra.mxu0 0.0
      %846 = vmatprep.subr.mxu0 0.0
      %847 = vmatpush1.msra.mxu0 0.0
      %848 = vmatprep.subr.mxu0 0.0
      %849 = vmatpush1.msra.mxu0 0.0
      %850 = vmatprep.subr.mxu0 0.0
      %851 = vmatpush1.msra.mxu0 0.0
      %852 = vmatprep.subr.mxu0 0.0
      %853 = vmatpush1.msra.mxu0 0.0
      %854 = vmatprep.subr.mxu0 0.0
      %855 = vmatpush1.msra.mxu0 0.0
      %856 = vmatprep.subr.mxu0 0.0
      %857 = vmatpush1.msra.mxu0 0.0
      %858 = vmatprep.subr.mxu0 0.0
      %859 = vmatpush1.msra.mxu0 0.0
      %860 = vmatprep.subr.mxu0 0.0
      %861 = vmatpush1.msra.mxu0 0.0
      %862 = vmatprep.subr.mxu0 0.0
      %863 = vmatpush1.msra.mxu0 0.0
      %864 = vmatprep.subr.mxu0 0.0
      %865 = vmatpush1.msra.mxu0 0.0
      %866 = vmatprep.subr.mxu0 0.0
      %867 = vmatpush1.msra.mxu0 0.0
      %868 = vmatprep.subr.mxu0 0.0
      %869 = vmatpush1.msra.mxu0 0.0
      %870 = vmatprep.subr.mxu0 0.0
      %871 = vmatpush1.msra.mxu0 0.0
      %872 = vmatprep.subr.mxu0 0.0
      %873 = vmatpush1.msra.mxu0 0.0
      %874 = vmatprep.subr.mxu0 0.0
      %875 = vmatpush1.msra.mxu0 0.0
      %876 = vmatprep.subr.mxu0 0.0
      %877 = vmatpush1.msra.mxu0 0.0
      %878 = vmatprep.subr.mxu0 0.0
      %879 = vmatpush1.msra.mxu0 0.0
      %880 = vmatprep.subr.mxu0 0.0
      %881 = vmatpush1.msra.mxu0 0.0
      %882 = vmatprep.subr.mxu0 0.0
      %883 = vmatpush1.msra.mxu0 0.0
      %884 = vmatprep.mubr.f32.mxu0 0.0
      %885 = vmatmul.mubr.f32.gmra.mrb[0].mxu0 %v818
      %v886 = vpop.f32.mrb[0].mxu0
      %v887 = vadd.f32 %v814, %v886
      %v888 = vpop.f32.mrb[0].mxu0
      %889 = vdwg.mxu0
      %v890 = vtanh.pop %v887
      %v891 = vld [vmem:[%s7] sm:$0xff]
      %v892 = vld [vmem:[%s7 + $0x8] sm:$0xff]
      %v893 = vld [vmem:[%s7 + $0x10] sm:$0xff]
      %v894 = vld [vmem:[%s8] sm:$0xff]
      %v895 = vld [vmem:[%s8 + $0x8] sm:$0xff]
      %v896 = vld [vmem:[%s8 + $0x10] sm:$0xff]
      %898 = vset.pattern.permute.xlu0 0
      %899 = vperm.xlu0 %898, %v894
      %v900 = vpop.permute.xlu0 %899
      %903 = vset.pattern.permute.xlu0 0
      %904 = vperm.xlu0 %903, %v895
      %v905 = vpop.permute.xlu0 %904
      %908 = vset.pattern.permute.xlu0 0
      %909 = vperm.xlu0 %908, %v896
      %v910 = vpop.permute.xlu0 %909
      %vm912 = vcmask 64512
      %v914 = vsel %vm912, %v891, 0
      %v917 = vsel %vm912, %v892, 0
      %v920 = vsel %vm912, %v893, 0
      %922 = vmatprep.subr.mxu0 0.0
      %923 = vmatpush1.msra.mxu0 %v890
      %924 = vmatprep.subr.mxu0 0.0
      %925 = vmatpush1.msra.mxu0 0.0
      %926 = vmatprep.subr.mxu0 0.0
      %927 = vmatpush1.msra.mxu0 0.0
      %928 = vmatprep.subr.mxu0 0.0
      %929 = vmatpush1.msra.mxu0 0.0
      %930 = vmatprep.subr.mxu0 0.0
      %931 = vmatpush1.msra.mxu0 0.0
      %932 = vmatprep.subr.mxu0 0.0
      %933 = vmatpush1.msra.mxu0 0.0
      %934 = vmatprep.subr.mxu0 0.0
      %935 = vmatpush1.msra.mxu0 0.0
      %936 = vmatprep.subr.mxu0 0.0
      %937 = vmatpush1.msra.mxu0 0.0
      %938 = vmatprep.subr.mxu0 0.0
      %939 = vmatpush1.msra.mxu0 0.0
      %940 = vmatprep.subr.mxu0 0.0
      %941 = vmatpush1.msra.mxu0 0.0
      %942 = vmatprep.subr.mxu0 0.0
      %943 = vmatpush1.msra.mxu0 0.0
      %944 = vmatprep.subr.mxu0 0.0
      %945 = vmatpush1.msra.mxu0 0.0
      %946 = vmatprep.subr.mxu0 0.0
      %947 = vmatpush1.msra.mxu0 0.0
      %948 = vmatprep.subr.mxu0 0.0
      %949 = vmatpush1.msra.mxu0 0.0
      %950 = vmatprep.subr.mxu0 0.0
      %951 = vmatpush1.msra.mxu0 0.0
      %952 = vmatprep.subr.mxu0 0.0
      %953 = vmatpush1.msra.mxu0 0.0
      %954 = vmatprep.subr.mxu0 0.0
      %955 = vmatpush1.msra.mxu0 0.0
      %956 = vmatprep.subr.mxu0 0.0
      %957 = vmatpush1.msra.mxu0 0.0
      %958 = vmatprep.subr.mxu0 0.0
      %959 = vmatpush1.msra.mxu0 0.0
      %960 = vmatprep.subr.mxu0 0.0
      %961 = vmatpush1.msra.mxu0 0.0
      %962 = vmatprep.subr.mxu0 0.0
      %963 = vmatpush1.msra.mxu0 0.0
      %964 = vmatprep.subr.mxu0 0.0
      %965 = vmatpush1.msra.mxu0 0.0
      %966 = vmatprep.subr.mxu0 0.0
      %967 = vmatpush1.msra.mxu0 0.0
      %968 = vmatprep.subr.mxu0 0.0
      %969 = vmatpush1.msra.mxu0 0.0
      %970 = vmatprep.subr.mxu0 0.0
      %971 = vmatpush1.msra.mxu0 0.0
      %972 = vmatprep.subr.mxu0 0.0
      %973 = vmatpush1.msra.mxu0 0.0
      %974 = vmatprep.subr.mxu0 0.0
      %975 = vmatpush1.msra.mxu0 0.0
      %976 = vmatprep.subr.mxu0 0.0
      %977 = vmatpush1.msra.mxu0 0.0
      %978 = vmatprep.subr.mxu0 0.0
      %979 = vmatpush1.msra.mxu0 0.0
      %980 = vmatprep.subr.mxu0 0.0
      %981 = vmatpush1.msra.mxu0 0.0
      %982 = vmatprep.subr.mxu0 0.0
      %983 = vmatpush1.msra.mxu0 0.0
      %984 = vmatprep.subr.mxu0 0.0
      %985 = vmatpush1.msra.mxu0 0.0
      %986 = vmatprep.mubr.f32.mxu0 0.0
      %987 = vmatmul.mubr.f32.gmra.mrb[0].mxu0 %v914
      %v988 = vpop.f32.mrb[0].mxu0
      %v989 = vadd.f32 %v900, %v988
      %v990 = vpop.f32.mrb[0].mxu0
      %991 = vmatprep.mubr.f32.mxu0 0.0
      %992 = vmatmul.mubr.f32.gmra.mrb[0].mxu0 %v917
      %v993 = vpop.f32.mrb[0].mxu0
      %v994 = vadd.f32 %v905, %v993
      %v995 = vpop.f32.mrb[0].mxu0
      %996 = vmatprep.mubr.f32.mxu0 0.0
      %997 = vmatmul.mubr.f32.gmra.mrb[0].mxu0 %v920
      %v998 = vpop.f32.mrb[0].mxu0
      %v999 = vadd.f32 %v910, %v998
      %v1000 = vpop.f32.mrb[0].mxu0
      %1001 = vdwg.mxu0
      %v1002 = vtanh.pop %v989
      %v1003 = vtanh.pop %v994
      %v1004 = vtanh.pop %v999
      %v1005 = vld [vmem:[%s9] sm:$0xff]
      %v1006 = vld [vmem:[%s9 + $0x8] sm:$0xff]
      %v1007 = vld [vmem:[%s9 + $0x10] sm:$0xff]
      %v1008 = vld [vmem:[%s9 + $0x18] sm:$0xff]
      %v1009 = vld [vmem:[%s9 + $0x20] sm:$0xff]
      %v1010 = vld [vmem:[%s10] sm:$0xff]
      %v1011 = vld [vmem:[%s10 + $0x8] sm:$0xff]
      %v1012 = vld [vmem:[%s10 + $0x10] sm:$0xff]
      %v1013 = vld [vmem:[%s10 + $0x18] sm:$0xff]
      %v1014 = vld [vmem:[%s10 + $0x20] sm:$0xff]
      %1016 = vset.pattern.permute.xlu0 0
      %1017 = vperm.xlu0 %1016, %v1010
      %v1018 = vpop.permute.xlu0 %1017
      %1021 = vset.pattern.permute.xlu0 0
      %1022 = vperm.xlu0 %1021, %v1011
      %v1023 = vpop.permute.xlu0 %1022
      %1026 = vset.pattern.permute.xlu0 0
      %1027 = vperm.xlu0 %1026, %v1012
      %v1028 = vpop.permute.xlu0 %1027
      %1031 = vset.pattern.permute.xlu0 0
      %1032 = vperm.xlu0 %1031, %v1013
      %v1033 = vpop.permute.xlu0 %1032
      %1036 = vset.pattern.permute.xlu0 0
      %1037 = vperm.xlu0 %1036, %v1014
      %v1038 = vpop.permute.xlu0 %1037
      %v1041 = vsel %vm816, %v1005, 0
      %v1044 = vsel %vm816, %v1006, 0
      %v1047 = vsel %vm816, %v1007, 0
      %v1050 = vsel %vm816, %v1008, 0
      %v1053 = vsel %vm816, %v1009, 0
      %1055 = vmatprep.subr.mxu0 0.0
      %1056 = vmatpush1.msra.mxu0 %v1002
      %1057 = vmatprep.subr.mxu0 0.0
      %1058 = vmatpush1.msra.mxu0 %v1003
      %1059 = vmatprep.subr.mxu0 0.0
      %1060 = vmatpush1.msra.mxu0 %v1004
      %1061 = vmatprep.subr.mxu0 0.0
      %1062 = vmatpush1.msra.mxu0 0.0
      %1063 = vmatprep.subr.mxu0 0.0
      %1064 = vmatpush1.msra.mxu0 0.0
      %1065 = vmatprep.subr.mxu0 0.0
      %1066 = vmatpush1.msra.mxu0 0.0
      %1067 = vmatprep.subr.mxu0 0.0
      %1068 = vmatpush1.msra.mxu0 0.0
      %1069 = vmatprep.subr.mxu0 0.0
      %1070 = vmatpush1.msra.mxu0 0.0
      %1071 = vmatprep.subr.mxu0 0.0
      %1072 = vmatpush1.msra.mxu0 0.0
      %1073 = vmatprep.subr.mxu0 0.0
      %1074 = vmatpush1.msra.mxu0 0.0
      %1075 = vmatprep.subr.mxu0 0.0
      %1076 = vmatpush1.msra.mxu0 0.0
      %1077 = vmatprep.subr.mxu0 0.0
      %1078 = vmatpush1.msra.mxu0 0.0
      %1079 = vmatprep.subr.mxu0 0.0
      %1080 = vmatpush1.msra.mxu0 0.0
      %1081 = vmatprep.subr.mxu0 0.0
      %1082 = vmatpush1.msra.mxu0 0.0
      %1083 = vmatprep.subr.mxu0 0.0
      %1084 = vmatpush1.msra.mxu0 0.0
      %1085 = vmatprep.subr.mxu0 0.0
      %1086 = vmatpush1.msra.mxu0 0.0
      %1087 = vmatprep.subr.mxu0 0.0
      %1088 = vmatpush1.msra.mxu0 0.0
      %1089 = vmatprep.subr.mxu0 0.0
      %1090 = vmatpush1.msra.mxu0 0.0
      %1091 = vmatprep.subr.mxu0 0.0
      %1092 = vmatpush1.msra.mxu0 0.0
      %1093 = vmatprep.subr.mxu0 0.0
      %1094 = vmatpush1.msra.mxu0 0.0
      %1095 = vmatprep.subr.mxu0 0.0
      %1096 = vmatpush1.msra.mxu0 0.0
      %1097 = vmatprep.subr.mxu0 0.0
      %1098 = vmatpush1.msra.mxu0 0.0
      %1099 = vmatprep.subr.mxu0 0.0
      %1100 = vmatpush1.msra.mxu0 0.0
      %1101 = vmatprep.subr.mxu0 0.0
      %1102 = vmatpush1.msra.mxu0 0.0
      %1103 = vmatprep.subr.mxu0 0.0
      %1104 = vmatpush1.msra.mxu0 0.0
      %1105 = vmatprep.subr.mxu0 0.0
      %1106 = vmatpush1.msra.mxu0 0.0
      %1107 = vmatprep.subr.mxu0 0.0
      %1108 = vmatpush1.msra.mxu0 0.0
      %1109 = vmatprep.subr.mxu0 0.0
      %1110 = vmatpush1.msra.mxu0 0.0
      %1111 = vmatprep.subr.mxu0 0.0
      %1112 = vmatpush1.msra.mxu0 0.0
      %1113 = vmatprep.subr.mxu0 0.0
      %1114 = vmatpush1.msra.mxu0 0.0
      %1115 = vmatprep.subr.mxu0 0.0
      %1116 = vmatpush1.msra.mxu0 0.0
      %1117 = vmatprep.subr.mxu0 0.0
      %1118 = vmatpush1.msra.mxu0 0.0
      %1119 = vmatprep.mubr.f32.mxu0 0.0
      %1120 = vmatmul.mubr.f32.gmra.mrb[0].mxu0 %v1041
      %v1121 = vpop.f32.mrb[0].mxu0
      %v1122 = vadd.f32 %v1018, %v1121
      %v1123 = vpop.f32.mrb[0].mxu0
      %1124 = vmatprep.mubr.f32.mxu0 0.0
      %1125 = vmatmul.mubr.f32.gmra.mrb[0].mxu0 %v1044
      %v1126 = vpop.f32.mrb[0].mxu0
      %v1127 = vadd.f32 %v1023, %v1126
      %v1128 = vpop.f32.mrb[0].mxu0
      %1129 = vmatprep.mubr.f32.mxu0 0.0
      %1130 = vmatmul.mubr.f32.gmra.mrb[0].mxu0 %v1047
      %v1131 = vpop.f32.mrb[0].mxu0
      %v1132 = vadd.f32 %v1028, %v1131
      %v1133 = vpop.f32.mrb[0].mxu0
      %1134 = vmatprep.mubr.f32.mxu0 0.0
      %1135 = vmatmul.mubr.f32.gmra.mrb[0].mxu0 %v1050
      %v1136 = vpop.f32.mrb[0].mxu0
      %v1137 = vadd.f32 %v1033, %v1136
      %v1138 = vpop.f32.mrb[0].mxu0
      %1139 = vmatprep.mubr.f32.mxu0 0.0
      %1140 = vmatmul.mubr.f32.gmra.mrb[0].mxu0 %v1053
      %v1141 = vpop.f32.mrb[0].mxu0
      %v1142 = vadd.f32 %v1038, %v1141
      %v1143 = vpop.f32.mrb[0].mxu0
      %1144 = vdwg.mxu0
      %v1145 = vtanh.pop %v1122
      %v1146 = vtanh.pop %v1127
      %v1147 = vtanh.pop %v1132
      %v1148 = vtanh.pop %v1137
      %v1149 = vtanh.pop %v1142
      %v1150 = vld [vmem:[%s11] sm:$0xff]
      %v1151 = vld [vmem:[%s11 + $0x8] sm:$0xff]
      %v1152 = vld [vmem:[%s11 + $0x10] sm:$0xff]
      %v1153 = vld [vmem:[%s12] sm:$0xff]
      %v1154 = vld [vmem:[%s12 + $0x8] sm:$0xff]
      %v1155 = vld [vmem:[%s12 + $0x10] sm:$0xff]
      %1157 = vset.pattern.permute.xlu0 0
      %1158 = vperm.xlu0 %1157, %v1153
      %v1159 = vpop.permute.xlu0 %1158
      %1162 = vset.pattern.permute.xlu0 0
      %1163 = vperm.xlu0 %1162, %v1154
      %v1164 = vpop.permute.xlu0 %1163
      %1167 = vset.pattern.permute.xlu0 0
      %1168 = vperm.xlu0 %1167, %v1155
      %v1169 = vpop.permute.xlu0 %1168
      %v1172 = vsel %vm716, %v1150, 0
      %v1175 = vsel %vm716, %v1151, 0
      %v1178 = vsel %vm716, %v1152, 0
      %1180 = vmatprep.subr.mxu0 0.0
      %1181 = vmatpush1.msra.mxu0 %v1145
      %1182 = vmatprep.subr.mxu0 0.0
      %1183 = vmatpush1.msra.mxu0 %v1146
      %1184 = vmatprep.subr.mxu0 0.0
      %1185 = vmatpush1.msra.mxu0 %v1147
      %1186 = vmatprep.subr.mxu0 0.0
      %1187 = vmatpush1.msra.mxu0 %v1148
      %1188 = vmatprep.subr.mxu0 0.0
      %1189 = vmatpush1.msra.mxu0 %v1149
      %1190 = vmatprep.subr.mxu0 0.0
      %1191 = vmatpush1.msra.mxu0 0.0
      %1192 = vmatprep.subr.mxu0 0.0
      %1193 = vmatpush1.msra.mxu0 0.0
      %1194 = vmatprep.subr.mxu0 0.0
      %1195 = vmatpush1.msra.mxu0 0.0
      %1196 = vmatprep.subr.mxu0 0.0
      %1197 = vmatpush1.msra.mxu0 0.0
      %1198 = vmatprep.subr.mxu0 0.0
      %1199 = vmatpush1.msra.mxu0 0.0
      %1200 = vmatprep.subr.mxu0 0.0
      %1201 = vmatpush1.msra.mxu0 0.0
      %1202 = vmatprep.subr.mxu0 0.0
      %1203 = vmatpush1.msra.mxu0 0.0
      %1204 = vmatprep.subr.mxu0 0.0
      %1205 = vmatpush1.msra.mxu0 0.0
      %1206 = vmatprep.subr.mxu0 0.0
      %1207 = vmatpush1.msra.mxu0 0.0
      %1208 = vmatprep.subr.mxu0 0.0
      %1209 = vmatpush1.msra.mxu0 0.0
      %1210 = vmatprep.subr.mxu0 0.0
      %1211 = vmatpush1.msra.mxu0 0.0
      %1212 = vmatprep.subr.mxu0 0.0
      %1213 = vmatpush1.msra.mxu0 0.0
      %1214 = vmatprep.subr.mxu0 0.0
      %1215 = vmatpush1.msra.mxu0 0.0
      %1216 = vmatprep.subr.mxu0 0.0
      %1217 = vmatpush1.msra.mxu0 0.0
      %1218 = vmatprep.subr.mxu0 0.0
      %1219 = vmatpush1.msra.mxu0 0.0
      %1220 = vmatprep.subr.mxu0 0.0
      %1221 = vmatpush1.msra.mxu0 0.0
      %1222 = vmatprep.subr.mxu0 0.0
      %1223 = vmatpush1.msra.mxu0 0.0
      %1224 = vmatprep.subr.mxu0 0.0
      %1225 = vmatpush1.msra.mxu0 0.0
      %1226 = vmatprep.subr.mxu0 0.0
      %1227 = vmatpush1.msra.mxu0 0.0
      %1228 = vmatprep.subr.mxu0 0.0
      %1229 = vmatpush1.msra.mxu0 0.0
      %1230 = vmatprep.subr.mxu0 0.0
      %1231 = vmatpush1.msra.mxu0 0.0
      %1232 = vmatprep.subr.mxu0 0.0
      %1233 = vmatpush1.msra.mxu0 0.0
      %1234 = vmatprep.subr.mxu0 0.0
      %1235 = vmatpush1.msra.mxu0 0.0
      %1236 = vmatprep.subr.mxu0 0.0
      %1237 = vmatpush1.msra.mxu0 0.0
      %1238 = vmatprep.subr.mxu0 0.0
      %1239 = vmatpush1.msra.mxu0 0.0
      %1240 = vmatprep.subr.mxu0 0.0
      %1241 = vmatpush1.msra.mxu0 0.0
      %1242 = vmatprep.subr.mxu0 0.0
      %1243 = vmatpush1.msra.mxu0 0.0
      %1244 = vmatprep.mubr.f32.mxu0 0.0
      %1245 = vmatmul.mubr.f32.gmra.mrb[0].mxu0 %v1172
      %v1246 = vpop.f32.mrb[0].mxu0
      %v1247 = vadd.f32 %v1159, %v1246
      %v1248 = vpop.f32.mrb[0].mxu0
      %1249 = vmatprep.mubr.f32.mxu0 0.0
      %1250 = vmatmul.mubr.f32.gmra.mrb[0].mxu0 %v1175
      %v1251 = vpop.f32.mrb[0].mxu0
      %v1252 = vadd.f32 %v1164, %v1251
      %v1253 = vpop.f32.mrb[0].mxu0
      %1254 = vmatprep.mubr.f32.mxu0 0.0
      %1255 = vmatmul.mubr.f32.gmra.mrb[0].mxu0 %v1178
      %v1256 = vpop.f32.mrb[0].mxu0
      %v1257 = vadd.f32 %v1169, %v1256
      %v1258 = vpop.f32.mrb[0].mxu0
      %1259 = vdwg.mxu0
      %1260 = vxpose.xlu0.b32.start [1/16] %v890, 128
      %1261 = vxpose.xlu0.b32.cont [2/16] 0.0, 128
      %1262 = vxpose.xlu0.b32.cont [3/16] 0.0, 128
      %1263 = vxpose.xlu0.b32.cont [4/16] 0.0, 128
      %1264 = vxpose.xlu0.b32.cont [5/16] 0.0, 128
      %1265 = vxpose.xlu0.b32.cont [6/16] 0.0, 128
      %1266 = vxpose.xlu0.b32.cont [7/16] 0.0, 128
      %1267 = vxpose.xlu0.b32.cont [8/16] 0.0, 128
      %1268 = vxpose.xlu0.b32.cont [9/16] 0.0, 128
      %1269 = vxpose.xlu0.b32.cont [10/16] 0.0, 128
      %1270 = vxpose.xlu0.b32.cont [11/16] 0.0, 128
      %1271 = vxpose.xlu0.b32.cont [12/16] 0.0, 128
      %1272 = vxpose.xlu0.b32.cont [13/16] 0.0, 128
      %1273 = vxpose.xlu0.b32.cont [14/16] 0.0, 128
      %1274 = vxpose.xlu0.b32.cont [15/16] 0.0, 128
      %1275 = vxpose.xlu0.b32.end [16/16] 0.0, 128
      %v1276 = vpop.trf.xlu0
      %v1277 = vpop.trf.xlu0
      %v1278 = vpop.trf.xlu0
      %v1279 = vpop.trf.xlu0
      %v1280 = vpop.trf.xlu0
      %v1281 = vpop.trf.xlu0
      %v1282 = vpop.trf.xlu0
      %v1283 = vpop.trf.xlu0
      %v1284 = vpop.trf.xlu0
      %v1285 = vpop.trf.xlu0
      %v1286 = vpop.trf.xlu0
      %v1287 = vpop.trf.xlu0
      %v1288 = vpop.trf.xlu0
      %v1289 = vpop.trf.xlu0
      %v1290 = vpop.trf.xlu0
      %v1291 = vpop.trf.xlu0
      %vm1292 = vcmask 31744
      %1293 = vst.msk [vmem:[%s477] sm:$0xff] %vm1292, %v1276
      %1294 = vst.msk [vmem:[%s477 + $0x8] sm:$0xff] %vm1292, %v1277
      %1295 = vst.msk [vmem:[%s477 + $0x10] sm:$0xff] %vm1292, %v1278
      %1296 = vst.msk [vmem:[%s477 + $0x18] sm:$0xff] %vm1292, %v1279
      %1297 = vst.msk [vmem:[%s477 + $0x20] sm:$0xff] %vm1292, %v1280
      %1298 = vst.msk [vmem:[%s477 + $0x28] sm:$0xff] %vm1292, %v1281
      %1299 = vst.msk [vmem:[%s477 + $0x30] sm:$0xff] %vm1292, %v1282
      %1300 = vst.msk [vmem:[%s477 + $0x38] sm:$0xff] %vm1292, %v1283
      %1301 = vst.msk [vmem:[%s477 + $0x40] sm:$0xff] %vm1292, %v1284
      %1302 = vst.msk [vmem:[%s477 + $0x48] sm:$0xff] %vm1292, %v1285
      %1303 = vst.msk [vmem:[%s477 + $0x50] sm:$0xff] %vm1292, %v1286
      %1304 = vst.msk [vmem:[%s477 + $0x58] sm:$0xff] %vm1292, %v1287
      %1305 = vst.msk [vmem:[%s477 + $0x60] sm:$0xff] %vm1292, %v1288
      %1306 = vst.msk [vmem:[%s477 + $0x68] sm:$0xff] %vm1292, %v1289
      %1307 = vst.msk [vmem:[%s477 + $0x70] sm:$0xff] %vm1292, %v1290
      %1308 = vst.msk [vmem:[%s477 + $0x78] sm:$0xff] %vm1292, %v1291
      %1309 = vxpose.xlu0.b32.start [1/16] %v1247, 128
      %1310 = vxpose.xlu0.b32.cont [2/16] %v1252, 128
      %1311 = vxpose.xlu0.b32.cont [3/16] %v1257, 128
      %1312 = vxpose.xlu0.b32.cont [4/16] 0.0, 128
      %1313 = vxpose.xlu0.b32.cont [5/16] 0.0, 128
      %1314 = vxpose.xlu0.b32.cont [6/16] 0.0, 128
      %1315 = vxpose.xlu0.b32.cont [7/16] 0.0, 128
      %1316 = vxpose.xlu0.b32.cont [8/16] 0.0, 128
      %1317 = vxpose.xlu0.b32.cont [9/16] 0.0, 128
      %1318 = vxpose.xlu0.b32.cont [10/16] 0.0, 128
      %1319 = vxpose.xlu0.b32.cont [11/16] 0.0, 128
      %1320 = vxpose.xlu0.b32.cont [12/16] 0.0, 128
      %1321 = vxpose.xlu0.b32.cont [13/16] 0.0, 128
      %1322 = vxpose.xlu0.b32.cont [14/16] 0.0, 128
      %1323 = vxpose.xlu0.b32.cont [15/16] 0.0, 128
      %1324 = vxpose.xlu0.b32.end [16/16] 0.0, 128
      %v1325 = vpop.trf.xlu0
      %v1326 = vpop.trf.xlu0
      %v1327 = vpop.trf.xlu0
      %v1328 = vpop.trf.xlu0
      %v1329 = vpop.trf.xlu0
      %v1330 = vpop.trf.xlu0
      %v1331 = vpop.trf.xlu0
      %v1332 = vpop.trf.xlu0
      %v1333 = vpop.trf.xlu0
      %v1334 = vpop.trf.xlu0
      %v1335 = vpop.trf.xlu0
      %v1336 = vpop.trf.xlu0
      %v1337 = vpop.trf.xlu0
      %v1338 = vpop.trf.xlu0
      %v1339 = vpop.trf.xlu0
      %v1340 = vpop.trf.xlu0
      %1341 = vst.msk [vmem:[%s483] sm:$0xff] %vm536, %v1325
      %1342 = vst.msk [vmem:[%s483 + $0x8] sm:$0xff] %vm536, %v1326
      %1343 = vst.msk [vmem:[%s483 + $0x10] sm:$0xff] %vm536, %v1327
      %1344 = vst.msk [vmem:[%s483 + $0x18] sm:$0xff] %vm536, %v1328
      %1345 = vst.msk [vmem:[%s483 + $0x20] sm:$0xff] %vm536, %v1329
      %1346 = vst.msk [vmem:[%s483 + $0x28] sm:$0xff] %vm536, %v1330
      %1347 = vst.msk [vmem:[%s483 + $0x30] sm:$0xff] %vm536, %v1331
      %1348 = vst.msk [vmem:[%s483 + $0x38] sm:$0xff] %vm536, %v1332
      %1349 = vst.msk [vmem:[%s483 + $0x40] sm:$0xff] %vm536, %v1333
      %1350 = vst.msk [vmem:[%s483 + $0x48] sm:$0xff] %vm536, %v1334
      %1351 = vst.msk [vmem:[%s483 + $0x50] sm:$0xff] %vm536, %v1335
      %1352 = vst.msk [vmem:[%s483 + $0x58] sm:$0xff] %vm536, %v1336
      %1353 = vst.msk [vmem:[%s483 + $0x60] sm:$0xff] %vm536, %v1337
      %1354 = vst.msk [vmem:[%s483 + $0x68] sm:$0xff] %vm536, %v1338
      %1355 = vst.msk [vmem:[%s483 + $0x70] sm:$0xff] %vm536, %v1339
      %1356 = vst.msk [vmem:[%s483 + $0x78] sm:$0xff] %vm536, %v1340
      %s1357 = smul.u32 16, %s26
      %p1358 = scmp.lt.s32.totalorder %s1357, 31
      %s1359 = scalar_select %p1358, %s1357, 31
      %s1360 = smul.addr %s1359, 8
      %s1361 = scalar_lea.vmem %s13, %s1360
      %s1362 = smul.u32 16, %s26
      %p1363 = scmp.lt.s32.totalorder %s1362, 31
      %s1364 = scalar_select %p1363, %s1362, 31
      %s1365 = smul.addr %s1364, 8
      %s1366 = scalar_lea.vmem %s14, %s1365
      // Predicated region
      $region73: #{tpu_custom_call.1} parent=71 // pred_check
        %p1367 = pneg %p322
      $region74: #{tpu_custom_call.1} parent=71 // pred_check_branch
        %1369 = sbr.rel (%p1367) target = $region76
      $region75: #{tpu_custom_call.1} parent=71 // pred_region
        %s1370 = smul.u32 16, %s26
      $region76: #{tpu_custom_call.1} parent=71 // pred_fallthru
        _
      // Predicated region
      $region77: #{tpu_custom_call.1} parent=71 // pred_check
        %p1371 = pneg %p348
      $region78: #{tpu_custom_call.1} parent=71 // pred_check_branch
        %1373 = sbr.rel (%p1371) target = $region80
      $region79: #{tpu_custom_call.1} parent=71 // pred_region
        %s1374 = smul.u32 16, %s26
      $region80: #{tpu_custom_call.1} parent=71 // pred_fallthru
        _
    $region72: #{tpu_custom_call.1} parent=5 // pred_fallthru
      _
    %p1375 = scmp.le.s32.totalorder 2, %s21
    // Predicated region
    $region81: #{tpu_custom_call.1} parent=5 // pred_check
      %p1376 = pneg %p1375
    $region82: #{tpu_custom_call.1} parent=5 // pred_check_branch
      %1378 = sbr.rel (%p1376) target = $region84
    $region83: #{tpu_custom_call.1} parent=5 // pred_region
      %s1379 = ssub.s32 %s21, 2
      // Predicated region
      $region85: #{tpu_custom_call.1} parent=83 // pred_check
        %p1380 = pneg %p328
      $region86: #{tpu_custom_call.1} parent=83 // pred_check_branch
        %1382 = sbr.rel (%p1380) target = $region88
      $region87: #{tpu_custom_call.1} parent=83 // pred_region
        %s1383 = smul.u32 16, %s27
        %p1384 = scmp.lt.s32.totalorder %s1383, 31
        %s1385 = scalar_select %p1384, %s1383, 31
        %s1386 = smul.addr %s1385, 8
        %s1387 = scalar_lea.vmem %s13, %s1386
      $region88: #{tpu_custom_call.1} parent=83 // pred_fallthru
        _
      // Predicated region
      $region89: #{tpu_custom_call.1} parent=83 // pred_check
        %p1388 = pneg %p354
      $region90: #{tpu_custom_call.1} parent=83 // pred_check_branch
        %1390 = sbr.rel (%p1388) target = $region92
      $region91: #{tpu_custom_call.1} parent=83 // pred_region
        %s1391 = smul.u32 16, %s27
        %p1392 = scmp.lt.s32.totalorder %s1391, 31
        %s1393 = scalar_select %p1392, %s1391, 31
        %s1394 = smul.addr %s1393, 8
        %s1395 = scalar_lea.vmem %s14, %s1394
      $region92: #{tpu_custom_call.1} parent=83 // pred_fallthru
        _
    $region84: #{tpu_custom_call.1} parent=5 // pred_fallthru
      _
  $region6: #{tpu_custom_call.1} parent=0 // loop_footer
    %s25 = sadd.s32 1, %s21
  $region7: #{tpu_custom_call.1} parent=0 // loop_footer_branch
    %20 = sbr.rel target = $region3
  $region8: #{tpu_custom_call.1} parent=0 // loop_exit
    _

</llo_original>
